<compile_context>
chip_gen: v7x
topology: tpu7x:2x2x1
jax: 0.10.0
libtpu: 0.0.40
codegen_flags: <defaults>
</compile_context>

<pallas_src>
import functools

import jax
import jax.numpy as jnp
import numpy as np
from jax.experimental import pallas as pl
from jax.experimental.pallas import tpu as pltpu

EMB = 32      # embedding_size
FEAT = 133    # 33 + 33 + 44 + 23
HID1 = 256    # hidden1 width / LSTM input width


def _relu(x):
    return jnp.maximum(x, 0.0)


def _round_up(x, m):
    return ((x + m - 1) // m) * m


def dqn_lstm_kernel(
    x_ref,                          # (T*B, 133)    time-major rows: t*B + b
    w_emb, b_emb,                   # (133, 128), (1, 128)   block-diag fused embeddings
    w_h1, b_h1,                     # (128, 256), (1, 256)
    w_ih, w_hh, b_lstm,             # (256, 4Hp), (Hp, 4Hp), (1, 4Hp)  gate-major padded
    w_o1, b_o1,                     # (Hp, 256), (1, 256)
    w_o2, b_o2,                     # (256, Op), (1, Op)
    h0_ref, c0_ref,                 # (B, Hp) padded with zeros
    out_ref, hx_ref, cx_ref,        # (T*B, Op), (B, Hp), (B, Hp)
):
    Hp = hx_ref.shape[-1]
    TB = x_ref.shape[0]
    B = h0_ref.shape[0]
    T = TB // B

    # ---- hoisted, non-recurrent part: batched over all T*B rows ------------
    x = x_ref[...]                                                       # (TB, 133)
    e = _relu(jnp.dot(x, w_emb[...], preferred_element_type=jnp.float32)
              + b_emb[...])                                              # (TB, 128)
    xh = _relu(jnp.dot(e, w_h1[...], preferred_element_type=jnp.float32)
               + b_h1[...])                                              # (TB, 256)
    # input-to-gates contribution (+ LSTM bias) for every timestep at once
    pre = (jnp.dot(xh, w_ih[...], preferred_element_type=jnp.float32)
           + b_lstm[...])                                                # (TB, 4Hp)
    pre_t = [pre[t * B:(t + 1) * B, :] for t in range(T)]                # static slices

    # ---- serial LSTM recurrence (T is small & static -> unrolled) ----------
    h = h0_ref[...].astype(jnp.float32)                                  # (B, Hp)
    c = c0_ref[...].astype(jnp.float32)
    hs = []
    for t in range(T):
        g = pre_t[t] + jnp.dot(h, w_hh[...],
                               preferred_element_type=jnp.float32)       # (B, 4Hp)
        # gate-major, Hp-wide (lane-aligned) blocks: i | f | g | o
        i_g = jax.nn.sigmoid(g[:, 0 * Hp:1 * Hp])
        f_g = jax.nn.sigmoid(g[:, 1 * Hp:2 * Hp])
        g_g = jnp.tanh(g[:, 2 * Hp:3 * Hp])
        o_g = jax.nn.sigmoid(g[:, 3 * Hp:4 * Hp])
        c = f_g * c + i_g * g_g
        h = o_g * jnp.tanh(c)
        hs.append(h)

    # ---- hoisted output head on all hidden states, lane-dense writeback ----
    h_all = jnp.concatenate(hs, axis=0)                                  # (TB, Hp)
    y = _relu(jnp.dot(h_all, w_o1[...], preferred_element_type=jnp.float32)
              + b_o1[...])                                               # (TB, 256)
    y = jnp.dot(y, w_o2[...], preferred_element_type=jnp.float32) + b_o2[...]

    out_ref[...] = y.astype(out_ref.dtype)
    hx_ref[...] = h.astype(hx_ref.dtype)
    cx_ref[...] = c.astype(cx_ref.dtype)


def dqn_lstm_latefusion(inputs, hidden, fused, output_size):
    """inputs: (B, T, 133); hidden: (h0, c0) each (1, B, H).  Returns
    (q_values (B, T, O), (hx (1,B,H), cx (1,B,H))) -- matching the PyTorch forward."""
    B, T, F = inputs.shape
    assert F == FEAT
    h0, c0 = hidden
    H = h0.shape[-1]
    Hp = fused["w_hh"].shape[0]
    Op = fused["w_o2"].shape[1]

    # time-major, rows = (t, b) pairs
    x_tm = jnp.transpose(inputs, (1, 0, 2)).reshape(T * B, F)
    h0p = jnp.pad(h0[0].astype(jnp.float32), ((0, 0), (0, Hp - H)))
    c0p = jnp.pad(c0[0].astype(jnp.float32), ((0, 0), (0, Hp - H)))

    order = ["w_emb", "b_emb", "w_h1", "b_h1", "w_ih", "w_hh", "b_lstm",
             "w_o1", "b_o1", "w_o2", "b_o2"]
    weights = [fused[k] for k in order]

    out_shape = (jax.ShapeDtypeStruct((T * B, Op), jnp.float32),
                 jax.ShapeDtypeStruct((B, Hp), jnp.float32),
                 jax.ShapeDtypeStruct((B, Hp), jnp.float32))

    q_pad, hx, cx = pl.pallas_call(
        dqn_lstm_kernel,
        out_shape=out_shape,
    )(x_tm, *weights, h0p, c0p)

    q = q_pad.reshape(T, B, Op)[:, :, :output_size]     # drop lane padding
    q = jnp.transpose(q, (1, 0, 2))                     # back to batch-first
    return q, (hx[:, :H][None], cx[:, :H][None])


def make_params(key, hidden_size_lstm, output_size):
    """Deterministic synthetic parameters (PyTorch-Linear layout, pre-transposed
    to (in, out); biases kept 2-D (1, out))."""
    ks = jax.random.split(key, 16)

    def lin(k, fan_in, fan_out):
        bound = 1.0 / np.sqrt(fan_in)
        kw, kb = jax.random.split(k)
        w = jax.random.uniform(kw, (fan_in, fan_out), jnp.float32, -bound, bound)
        b = jax.random.uniform(kb, (1, fan_out), jnp.float32, -bound, bound)
        return w, b

    H = hidden_size_lstm
    p = {}
    p["w_acp"], p["b_acp"] = lin(ks[0], 33, EMB)
    p["w_acr"], p["b_acr"] = lin(ks[1], 33, EMB)
    p["w_vwm"], p["b_vwm"] = lin(ks[2], 44, EMB)
    p["w_oit"], p["b_oit"] = lin(ks[3], 23, EMB)
    p["w_h1"], p["b_h1"] = lin(ks[4], 4 * EMB, HID1)
    # LSTM: weight_ih (4H, 256)^T, weight_hh (4H, H)^T; biases zero (init_lstm_weights).
    p["w_ih"] = 0.05 * jax.random.normal(ks[5], (HID1, 4 * H), jnp.float32)
    p["w_hh"] = 0.05 * jax.random.normal(ks[6], (H, 4 * H), jnp.float32)
    p["b_lstm"] = jnp.zeros((1, 4 * H), jnp.float32)
    p["w_o1"], p["b_o1"] = lin(ks[7], H, 256)
    p["w_o2"], p["b_o2"] = lin(ks[8], 256, output_size)
    return p


def fuse_params(p, H, O):
    """Build kernel-ready weights: block-diagonal fused embedding, gate-major
    lane-padded LSTM weights (Hp = 128-multiple), lane-padded output head."""
    Hp = _round_up(max(H, 1), 128)
    Op = _round_up(max(O, 1), 128)

    f = {}
    w_emb = jnp.zeros((FEAT, 4 * EMB), jnp.float32)
    w_emb = w_emb.at[0:33, 0 * EMB:1 * EMB].set(p["w_acp"])
    w_emb = w_emb.at[33:66, 1 * EMB:2 * EMB].set(p["w_acr"])
    w_emb = w_emb.at[66:110, 2 * EMB:3 * EMB].set(p["w_vwm"])
    w_emb = w_emb.at[110:133, 3 * EMB:4 * EMB].set(p["w_oit"])
    f["w_emb"] = w_emb
    f["b_emb"] = jnp.concatenate(
        [p["b_acp"], p["b_acr"], p["b_vwm"], p["b_oit"]], axis=1)

    f["w_h1"], f["b_h1"] = p["w_h1"], p["b_h1"]

    def pad_gate_cols(w):
        # (..., 4H) in gate order i,f,g,o -> (..., 4*Hp), each gate zero-padded to Hp cols
        parts = [w[..., k * H:(k + 1) * H] for k in range(4)]
        pads = [(0, 0)] * (w.ndim - 1) + [(0, Hp - H)]
        return jnp.concatenate([jnp.pad(q, pads) for q in parts], axis=-1)

    f["w_ih"] = pad_gate_cols(p["w_ih"])                                   # (256, 4Hp)
    f["w_hh"] = jnp.pad(pad_gate_cols(p["w_hh"]), ((0, Hp - H), (0, 0)))   # (Hp, 4Hp)
    f["b_lstm"] = pad_gate_cols(p["b_lstm"])                               # (1, 4Hp)

    f["w_o1"] = jnp.pad(p["w_o1"], ((0, Hp - H), (0, 0)))                  # (Hp, 256)
    f["b_o1"] = p["b_o1"]
    f["w_o2"] = jnp.pad(p["w_o2"], ((0, 0), (0, Op - O)))                  # (256, Op)
    f["b_o2"] = jnp.pad(p["b_o2"], ((0, 0), (0, Op - O)))                  # (1, Op)
    return f


def reference(inputs, hidden, p):
    """Pure-JAX reference of the same forward (for a sanity check)."""
    x1 = jax.nn.relu(inputs[..., 0:33] @ p["w_acp"] + p["b_acp"][0])
    x2 = jax.nn.relu(inputs[..., 33:66] @ p["w_acr"] + p["b_acr"][0])
    x3 = jax.nn.relu(inputs[..., 66:110] @ p["w_vwm"] + p["b_vwm"][0])
    x4 = jax.nn.relu(inputs[..., 110:133] @ p["w_oit"] + p["b_oit"][0])
    xc = jnp.concatenate([x1, x2, x3, x4], axis=-1)
    xh = jax.nn.relu(xc @ p["w_h1"] + p["b_h1"][0])     # (B, T, 256)

    h0, c0 = hidden[0][0], hidden[1][0]
    H = h0.shape[-1]

    def step(carry, x_t):
        h, c = carry
        g = x_t @ p["w_ih"] + h @ p["w_hh"] + p["b_lstm"][0]
        i = jax.nn.sigmoid(g[:, 0:H]); f = jax.nn.sigmoid(g[:, H:2 * H])
        gg = jnp.tanh(g[:, 2 * H:3 * H]); o = jax.nn.sigmoid(g[:, 3 * H:4 * H])
        c = f * c + i * gg
        h = o * jnp.tanh(c)
        return (h, c), h

    (hx, cx), outs = jax.lax.scan(step, (h0, c0), jnp.transpose(xh, (1, 0, 2)))
    outs = jnp.transpose(outs, (1, 0, 2))                # (B, T, H)
    y = jax.nn.relu(outs @ p["w_o1"] + p["b_o1"][0]) @ p["w_o2"] + p["b_o2"][0]
    return y, (hx[None], cx[None])


if __name__ == "__main__":
    B, T = 2, 8
    HIDDEN_SIZE_LSTM = 32
    OUTPUT_SIZE = 16

    key = jax.random.PRNGKey(0)
    k_in, k_h, k_c, k_p = jax.random.split(key, 4)

    inputs = jax.random.normal(k_in, (B, T, FEAT), jnp.float32)
    h0 = jax.random.normal(k_h, (1, B, HIDDEN_SIZE_LSTM), jnp.float32)
    c0 = jax.random.normal(k_c, (1, B, HIDDEN_SIZE_LSTM), jnp.float32)
    params = make_params(k_p, HIDDEN_SIZE_LSTM, OUTPUT_SIZE)
    fused = fuse_params(params, HIDDEN_SIZE_LSTM, OUTPUT_SIZE)

    run = jax.jit(functools.partial(dqn_lstm_latefusion,
                                    fused=fused, output_size=OUTPUT_SIZE))
    q, (hx, cx) = run(inputs, (h0, c0))
    jax.block_until_ready((q, hx, cx))

    q_ref, (hx_ref, cx_ref) = reference(inputs, (h0, c0), params)
    np.testing.assert_allclose(np.asarray(q), np.asarray(q_ref), rtol=2e-3, atol=2e-3)
    np.testing.assert_allclose(np.asarray(hx), np.asarray(hx_ref), rtol=2e-3, atol=2e-3)
    np.testing.assert_allclose(np.asarray(cx), np.asarray(cx_ref), rtol=2e-3, atol=2e-3)

    print("KERNEL_OK")
</pallas_src>

<mosaic_0001>
module attributes {stable_mosaic.version = 11 : i64} {
  func.func @dqn_lstm_kernel(%arg0: memref<16x133xf32, #tpu.memory_space<vmem>>, %arg1: memref<133x128xf32, #tpu.memory_space<vmem>>, %arg2: memref<1x128xf32, #tpu.memory_space<vmem>>, %arg3: memref<128x256xf32, #tpu.memory_space<vmem>>, %arg4: memref<1x256xf32, #tpu.memory_space<vmem>>, %arg5: memref<256x512xf32, #tpu.memory_space<vmem>>, %arg6: memref<128x512xf32, #tpu.memory_space<vmem>>, %arg7: memref<1x512xf32, #tpu.memory_space<vmem>>, %arg8: memref<128x256xf32, #tpu.memory_space<vmem>>, %arg9: memref<1x256xf32, #tpu.memory_space<vmem>>, %arg10: memref<256x128xf32, #tpu.memory_space<vmem>>, %arg11: memref<1x128xf32, #tpu.memory_space<vmem>>, %arg12: memref<2x128xf32, #tpu.memory_space<vmem>>, %arg13: memref<2x128xf32, #tpu.memory_space<vmem>>, %arg14: memref<16x128xf32, #tpu.memory_space<vmem>>, %arg15: memref<2x128xf32, #tpu.memory_space<vmem>>, %arg16: memref<2x128xf32, #tpu.memory_space<vmem>>) attributes {dimension_semantics = [], scalar_prefetch = 0 : i64, scratch_operands = 0 : i64, tpu.core_type = #tpu.core_type<tc>} {
    %c0 = arith.constant 0 : index
    %c0_0 = arith.constant 0 : index
    %0 = vector.load %arg0[%c0, %c0_0] : memref<16x133xf32, #tpu.memory_space<vmem>>, vector<16x133xf32>
    %c0_1 = arith.constant 0 : index
    %c0_2 = arith.constant 0 : index
    %1 = vector.load %arg1[%c0_1, %c0_2] : memref<133x128xf32, #tpu.memory_space<vmem>>, vector<133x128xf32>
    %cst = arith.constant dense<0.000000e+00> : vector<16x128xf32>
    %2 = tpu.matmul %0, %1, %cst {dimension_numbers = #tpu.dot_dimension_numbers<[1], [0], [0], [1], [0, 0, 1, 1], [], []>} : vector<16x133xf32>, vector<133x128xf32>, vector<16x128xf32> -> vector<16x128xf32>
    %c0_3 = arith.constant 0 : index
    %c0_4 = arith.constant 0 : index
    %3 = vector.load %arg2[%c0_3, %c0_4] : memref<1x128xf32, #tpu.memory_space<vmem>>, vector<1x128xf32>
    %4 = vector.broadcast %3 : vector<1x128xf32> to vector<16x128xf32>
    %5 = arith.addf %2, %4 : vector<16x128xf32>
    %cst_5 = arith.constant 0.000000e+00 : f32
    %6 = vector.broadcast %cst_5 : f32 to vector<16x128xf32>
    %7 = arith.maximumf %5, %6 : vector<16x128xf32>
    %c0_6 = arith.constant 0 : index
    %c0_7 = arith.constant 0 : index
    %8 = vector.load %arg3[%c0_6, %c0_7] : memref<128x256xf32, #tpu.memory_space<vmem>>, vector<128x256xf32>
    %cst_8 = arith.constant dense<0.000000e+00> : vector<16x256xf32>
    %9 = tpu.matmul %7, %8, %cst_8 {dimension_numbers = #tpu.dot_dimension_numbers<[1], [0], [0], [1], [0, 0, 1, 1], [], []>} : vector<16x128xf32>, vector<128x256xf32>, vector<16x256xf32> -> vector<16x256xf32>
    %c0_9 = arith.constant 0 : index
    %c0_10 = arith.constant 0 : index
    %10 = vector.load %arg4[%c0_9, %c0_10] : memref<1x256xf32, #tpu.memory_space<vmem>>, vector<1x256xf32>
    %11 = vector.broadcast %10 : vector<1x256xf32> to vector<16x256xf32>
    %12 = arith.addf %9, %11 : vector<16x256xf32>
    %cst_11 = arith.constant 0.000000e+00 : f32
    %13 = vector.broadcast %cst_11 : f32 to vector<16x256xf32>
    %14 = arith.maximumf %12, %13 : vector<16x256xf32>
    %c0_12 = arith.constant 0 : index
    %c0_13 = arith.constant 0 : index
    %15 = vector.load %arg5[%c0_12, %c0_13] : memref<256x512xf32, #tpu.memory_space<vmem>>, vector<256x512xf32>
    %cst_14 = arith.constant dense<0.000000e+00> : vector<16x512xf32>
    %16 = tpu.matmul %14, %15, %cst_14 {dimension_numbers = #tpu.dot_dimension_numbers<[1], [0], [0], [1], [0, 0, 1, 1], [], []>} : vector<16x256xf32>, vector<256x512xf32>, vector<16x512xf32> -> vector<16x512xf32>
    %c0_15 = arith.constant 0 : index
    %c0_16 = arith.constant 0 : index
    %17 = vector.load %arg7[%c0_15, %c0_16] : memref<1x512xf32, #tpu.memory_space<vmem>>, vector<1x512xf32>
    %18 = vector.broadcast %17 : vector<1x512xf32> to vector<16x512xf32>
    %19 = arith.addf %16, %18 : vector<16x512xf32>
    %20 = vector.extract_strided_slice %19 {offsets = [0, 0], sizes = [2, 512], strides = [1, 1]} : vector<16x512xf32> to vector<2x512xf32>
    %21 = vector.extract_strided_slice %19 {offsets = [2, 0], sizes = [2, 512], strides = [1, 1]} : vector<16x512xf32> to vector<2x512xf32>
    %22 = vector.extract_strided_slice %19 {offsets = [4, 0], sizes = [2, 512], strides = [1, 1]} : vector<16x512xf32> to vector<2x512xf32>
    %23 = vector.extract_strided_slice %19 {offsets = [6, 0], sizes = [2, 512], strides = [1, 1]} : vector<16x512xf32> to vector<2x512xf32>
    %24 = vector.extract_strided_slice %19 {offsets = [8, 0], sizes = [2, 512], strides = [1, 1]} : vector<16x512xf32> to vector<2x512xf32>
    %25 = vector.extract_strided_slice %19 {offsets = [10, 0], sizes = [2, 512], strides = [1, 1]} : vector<16x512xf32> to vector<2x512xf32>
    %26 = vector.extract_strided_slice %19 {offsets = [12, 0], sizes = [2, 512], strides = [1, 1]} : vector<16x512xf32> to vector<2x512xf32>
    %27 = vector.extract_strided_slice %19 {offsets = [14, 0], sizes = [2, 512], strides = [1, 1]} : vector<16x512xf32> to vector<2x512xf32>
    %c0_17 = arith.constant 0 : index
    %c0_18 = arith.constant 0 : index
    %28 = vector.load %arg12[%c0_17, %c0_18] : memref<2x128xf32, #tpu.memory_space<vmem>>, vector<2x128xf32>
    %c0_19 = arith.constant 0 : index
    %c0_20 = arith.constant 0 : index
    %29 = vector.load %arg13[%c0_19, %c0_20] : memref<2x128xf32, #tpu.memory_space<vmem>>, vector<2x128xf32>
    %c0_21 = arith.constant 0 : index
    %c0_22 = arith.constant 0 : index
    %30 = vector.load %arg6[%c0_21, %c0_22] : memref<128x512xf32, #tpu.memory_space<vmem>>, vector<128x512xf32>
    %cst_23 = arith.constant dense<0.000000e+00> : vector<2x512xf32>
    %31 = tpu.matmul %28, %30, %cst_23 {dimension_numbers = #tpu.dot_dimension_numbers<[1], [0], [0], [1], [0, 0, 1, 1], [], []>} : vector<2x128xf32>, vector<128x512xf32>, vector<2x512xf32> -> vector<2x512xf32>
    %32 = arith.addf %20, %31 : vector<2x512xf32>
    %33 = vector.extract_strided_slice %32 {offsets = [0, 0], sizes = [2, 128], strides = [1, 1]} : vector<2x512xf32> to vector<2x128xf32>
    %34 = arith.negf %33 : vector<2x128xf32>
    %35 = math.exp %34 : vector<2x128xf32>
    %cst_24 = arith.constant 1.000000e+00 : f32
    %36 = vector.broadcast %cst_24 : f32 to vector<2x128xf32>
    %37 = arith.addf %36, %35 : vector<2x128xf32>
    %38 = arith.divf %36, %37 : vector<2x128xf32>
    %39 = vector.extract_strided_slice %32 {offsets = [0, 128], sizes = [2, 128], strides = [1, 1]} : vector<2x512xf32> to vector<2x128xf32>
    %40 = arith.negf %39 : vector<2x128xf32>
    %41 = math.exp %40 : vector<2x128xf32>
    %cst_25 = arith.constant 1.000000e+00 : f32
    %42 = vector.broadcast %cst_25 : f32 to vector<2x128xf32>
    %43 = arith.addf %42, %41 : vector<2x128xf32>
    %44 = arith.divf %42, %43 : vector<2x128xf32>
    %45 = vector.extract_strided_slice %32 {offsets = [0, 256], sizes = [2, 128], strides = [1, 1]} : vector<2x512xf32> to vector<2x128xf32>
    %46 = math.tanh %45 : vector<2x128xf32>
    %47 = vector.extract_strided_slice %32 {offsets = [0, 384], sizes = [2, 128], strides = [1, 1]} : vector<2x512xf32> to vector<2x128xf32>
    %48 = arith.negf %47 : vector<2x128xf32>
    %49 = math.exp %48 : vector<2x128xf32>
    %cst_26 = arith.constant 1.000000e+00 : f32
    %50 = vector.broadcast %cst_26 : f32 to vector<2x128xf32>
    %51 = arith.addf %50, %49 : vector<2x128xf32>
    %52 = arith.divf %50, %51 : vector<2x128xf32>
    %53 = arith.mulf %44, %29 : vector<2x128xf32>
    %54 = arith.mulf %38, %46 : vector<2x128xf32>
    %55 = arith.addf %53, %54 : vector<2x128xf32>
    %56 = math.tanh %55 : vector<2x128xf32>
    %57 = arith.mulf %52, %56 : vector<2x128xf32>
    %c0_27 = arith.constant 0 : index
    %c0_28 = arith.constant 0 : index
    %58 = vector.load %arg6[%c0_27, %c0_28] : memref<128x512xf32, #tpu.memory_space<vmem>>, vector<128x512xf32>
    %cst_29 = arith.constant dense<0.000000e+00> : vector<2x512xf32>
    %59 = tpu.matmul %57, %58, %cst_29 {dimension_numbers = #tpu.dot_dimension_numbers<[1], [0], [0], [1], [0, 0, 1, 1], [], []>} : vector<2x128xf32>, vector<128x512xf32>, vector<2x512xf32> -> vector<2x512xf32>
    %60 = arith.addf %21, %59 : vector<2x512xf32>
    %61 = vector.extract_strided_slice %60 {offsets = [0, 0], sizes = [2, 128], strides = [1, 1]} : vector<2x512xf32> to vector<2x128xf32>
    %62 = arith.negf %61 : vector<2x128xf32>
    %63 = math.exp %62 : vector<2x128xf32>
    %cst_30 = arith.constant 1.000000e+00 : f32
    %64 = vector.broadcast %cst_30 : f32 to vector<2x128xf32>
    %65 = arith.addf %64, %63 : vector<2x128xf32>
    %66 = arith.divf %64, %65 : vector<2x128xf32>
    %67 = vector.extract_strided_slice %60 {offsets = [0, 128], sizes = [2, 128], strides = [1, 1]} : vector<2x512xf32> to vector<2x128xf32>
    %68 = arith.negf %67 : vector<2x128xf32>
    %69 = math.exp %68 : vector<2x128xf32>
    %cst_31 = arith.constant 1.000000e+00 : f32
    %70 = vector.broadcast %cst_31 : f32 to vector<2x128xf32>
    %71 = arith.addf %70, %69 : vector<2x128xf32>
    %72 = arith.divf %70, %71 : vector<2x128xf32>
    %73 = vector.extract_strided_slice %60 {offsets = [0, 256], sizes = [2, 128], strides = [1, 1]} : vector<2x512xf32> to vector<2x128xf32>
    %74 = math.tanh %73 : vector<2x128xf32>
    %75 = vector.extract_strided_slice %60 {offsets = [0, 384], sizes = [2, 128], strides = [1, 1]} : vector<2x512xf32> to vector<2x128xf32>
    %76 = arith.negf %75 : vector<2x128xf32>
    %77 = math.exp %76 : vector<2x128xf32>
    %cst_32 = arith.constant 1.000000e+00 : f32
    %78 = vector.broadcast %cst_32 : f32 to vector<2x128xf32>
    %79 = arith.addf %78, %77 : vector<2x128xf32>
    %80 = arith.divf %78, %79 : vector<2x128xf32>
    %81 = arith.mulf %72, %55 : vector<2x128xf32>
    %82 = arith.mulf %66, %74 : vector<2x128xf32>
    %83 = arith.addf %81, %82 : vector<2x128xf32>
    %84 = math.tanh %83 : vector<2x128xf32>
    %85 = arith.mulf %80, %84 : vector<2x128xf32>
    %c0_33 = arith.constant 0 : index
    %c0_34 = arith.constant 0 : index
    %86 = vector.load %arg6[%c0_33, %c0_34] : memref<128x512xf32, #tpu.memory_space<vmem>>, vector<128x512xf32>
    %cst_35 = arith.constant dense<0.000000e+00> : vector<2x512xf32>
    %87 = tpu.matmul %85, %86, %cst_35 {dimension_numbers = #tpu.dot_dimension_numbers<[1], [0], [0], [1], [0, 0, 1, 1], [], []>} : vector<2x128xf32>, vector<128x512xf32>, vector<2x512xf32> -> vector<2x512xf32>
    %88 = arith.addf %22, %87 : vector<2x512xf32>
    %89 = vector.extract_strided_slice %88 {offsets = [0, 0], sizes = [2, 128], strides = [1, 1]} : vector<2x512xf32> to vector<2x128xf32>
    %90 = arith.negf %89 : vector<2x128xf32>
    %91 = math.exp %90 : vector<2x128xf32>
    %cst_36 = arith.constant 1.000000e+00 : f32
    %92 = vector.broadcast %cst_36 : f32 to vector<2x128xf32>
    %93 = arith.addf %92, %91 : vector<2x128xf32>
    %94 = arith.divf %92, %93 : vector<2x128xf32>
    %95 = vector.extract_strided_slice %88 {offsets = [0, 128], sizes = [2, 128], strides = [1, 1]} : vector<2x512xf32> to vector<2x128xf32>
    %96 = arith.negf %95 : vector<2x128xf32>
    %97 = math.exp %96 : vector<2x128xf32>
    %cst_37 = arith.constant 1.000000e+00 : f32
    %98 = vector.broadcast %cst_37 : f32 to vector<2x128xf32>
    %99 = arith.addf %98, %97 : vector<2x128xf32>
    %100 = arith.divf %98, %99 : vector<2x128xf32>
    %101 = vector.extract_strided_slice %88 {offsets = [0, 256], sizes = [2, 128], strides = [1, 1]} : vector<2x512xf32> to vector<2x128xf32>
    %102 = math.tanh %101 : vector<2x128xf32>
    %103 = vector.extract_strided_slice %88 {offsets = [0, 384], sizes = [2, 128], strides = [1, 1]} : vector<2x512xf32> to vector<2x128xf32>
    %104 = arith.negf %103 : vector<2x128xf32>
    %105 = math.exp %104 : vector<2x128xf32>
    %cst_38 = arith.constant 1.000000e+00 : f32
    %106 = vector.broadcast %cst_38 : f32 to vector<2x128xf32>
    %107 = arith.addf %106, %105 : vector<2x128xf32>
    %108 = arith.divf %106, %107 : vector<2x128xf32>
    %109 = arith.mulf %100, %83 : vector<2x128xf32>
    %110 = arith.mulf %94, %102 : vector<2x128xf32>
    %111 = arith.addf %109, %110 : vector<2x128xf32>
    %112 = math.tanh %111 : vector<2x128xf32>
    %113 = arith.mulf %108, %112 : vector<2x128xf32>
    %c0_39 = arith.constant 0 : index
    %c0_40 = arith.constant 0 : index
    %114 = vector.load %arg6[%c0_39, %c0_40] : memref<128x512xf32, #tpu.memory_space<vmem>>, vector<128x512xf32>
    %cst_41 = arith.constant dense<0.000000e+00> : vector<2x512xf32>
    %115 = tpu.matmul %113, %114, %cst_41 {dimension_numbers = #tpu.dot_dimension_numbers<[1], [0], [0], [1], [0, 0, 1, 1], [], []>} : vector<2x128xf32>, vector<128x512xf32>, vector<2x512xf32> -> vector<2x512xf32>
    %116 = arith.addf %23, %115 : vector<2x512xf32>
    %117 = vector.extract_strided_slice %116 {offsets = [0, 0], sizes = [2, 128], strides = [1, 1]} : vector<2x512xf32> to vector<2x128xf32>
    %118 = arith.negf %117 : vector<2x128xf32>
    %119 = math.exp %118 : vector<2x128xf32>
    %cst_42 = arith.constant 1.000000e+00 : f32
    %120 = vector.broadcast %cst_42 : f32 to vector<2x128xf32>
    %121 = arith.addf %120, %119 : vector<2x128xf32>
    %122 = arith.divf %120, %121 : vector<2x128xf32>
    %123 = vector.extract_strided_slice %116 {offsets = [0, 128], sizes = [2, 128], strides = [1, 1]} : vector<2x512xf32> to vector<2x128xf32>
    %124 = arith.negf %123 : vector<2x128xf32>
    %125 = math.exp %124 : vector<2x128xf32>
    %cst_43 = arith.constant 1.000000e+00 : f32
    %126 = vector.broadcast %cst_43 : f32 to vector<2x128xf32>
    %127 = arith.addf %126, %125 : vector<2x128xf32>
    %128 = arith.divf %126, %127 : vector<2x128xf32>
    %129 = vector.extract_strided_slice %116 {offsets = [0, 256], sizes = [2, 128], strides = [1, 1]} : vector<2x512xf32> to vector<2x128xf32>
    %130 = math.tanh %129 : vector<2x128xf32>
    %131 = vector.extract_strided_slice %116 {offsets = [0, 384], sizes = [2, 128], strides = [1, 1]} : vector<2x512xf32> to vector<2x128xf32>
    %132 = arith.negf %131 : vector<2x128xf32>
    %133 = math.exp %132 : vector<2x128xf32>
    %cst_44 = arith.constant 1.000000e+00 : f32
    %134 = vector.broadcast %cst_44 : f32 to vector<2x128xf32>
    %135 = arith.addf %134, %133 : vector<2x128xf32>
    %136 = arith.divf %134, %135 : vector<2x128xf32>
    %137 = arith.mulf %128, %111 : vector<2x128xf32>
    %138 = arith.mulf %122, %130 : vector<2x128xf32>
    %139 = arith.addf %137, %138 : vector<2x128xf32>
    %140 = math.tanh %139 : vector<2x128xf32>
    %141 = arith.mulf %136, %140 : vector<2x128xf32>
    %c0_45 = arith.constant 0 : index
    %c0_46 = arith.constant 0 : index
    %142 = vector.load %arg6[%c0_45, %c0_46] : memref<128x512xf32, #tpu.memory_space<vmem>>, vector<128x512xf32>
    %cst_47 = arith.constant dense<0.000000e+00> : vector<2x512xf32>
    %143 = tpu.matmul %141, %142, %cst_47 {dimension_numbers = #tpu.dot_dimension_numbers<[1], [0], [0], [1], [0, 0, 1, 1], [], []>} : vector<2x128xf32>, vector<128x512xf32>, vector<2x512xf32> -> vector<2x512xf32>
    %144 = arith.addf %24, %143 : vector<2x512xf32>
    %145 = vector.extract_strided_slice %144 {offsets = [0, 0], sizes = [2, 128], strides = [1, 1]} : vector<2x512xf32> to vector<2x128xf32>
    %146 = arith.negf %145 : vector<2x128xf32>
    %147 = math.exp %146 : vector<2x128xf32>
    %cst_48 = arith.constant 1.000000e+00 : f32
    %148 = vector.broadcast %cst_48 : f32 to vector<2x128xf32>
    %149 = arith.addf %148, %147 : vector<2x128xf32>
    %150 = arith.divf %148, %149 : vector<2x128xf32>
    %151 = vector.extract_strided_slice %144 {offsets = [0, 128], sizes = [2, 128], strides = [1, 1]} : vector<2x512xf32> to vector<2x128xf32>
    %152 = arith.negf %151 : vector<2x128xf32>
    %153 = math.exp %152 : vector<2x128xf32>
    %cst_49 = arith.constant 1.000000e+00 : f32
    %154 = vector.broadcast %cst_49 : f32 to vector<2x128xf32>
    %155 = arith.addf %154, %153 : vector<2x128xf32>
    %156 = arith.divf %154, %155 : vector<2x128xf32>
    %157 = vector.extract_strided_slice %144 {offsets = [0, 256], sizes = [2, 128], strides = [1, 1]} : vector<2x512xf32> to vector<2x128xf32>
    %158 = math.tanh %157 : vector<2x128xf32>
    %159 = vector.extract_strided_slice %144 {offsets = [0, 384], sizes = [2, 128], strides = [1, 1]} : vector<2x512xf32> to vector<2x128xf32>
    %160 = arith.negf %159 : vector<2x128xf32>
    %161 = math.exp %160 : vector<2x128xf32>
    %cst_50 = arith.constant 1.000000e+00 : f32
    %162 = vector.broadcast %cst_50 : f32 to vector<2x128xf32>
    %163 = arith.addf %162, %161 : vector<2x128xf32>
    %164 = arith.divf %162, %163 : vector<2x128xf32>
    %165 = arith.mulf %156, %139 : vector<2x128xf32>
    %166 = arith.mulf %150, %158 : vector<2x128xf32>
    %167 = arith.addf %165, %166 : vector<2x128xf32>
    %168 = math.tanh %167 : vector<2x128xf32>
    %169 = arith.mulf %164, %168 : vector<2x128xf32>
    %c0_51 = arith.constant 0 : index
    %c0_52 = arith.constant 0 : index
    %170 = vector.load %arg6[%c0_51, %c0_52] : memref<128x512xf32, #tpu.memory_space<vmem>>, vector<128x512xf32>
    %cst_53 = arith.constant dense<0.000000e+00> : vector<2x512xf32>
    %171 = tpu.matmul %169, %170, %cst_53 {dimension_numbers = #tpu.dot_dimension_numbers<[1], [0], [0], [1], [0, 0, 1, 1], [], []>} : vector<2x128xf32>, vector<128x512xf32>, vector<2x512xf32> -> vector<2x512xf32>
    %172 = arith.addf %25, %171 : vector<2x512xf32>
    %173 = vector.extract_strided_slice %172 {offsets = [0, 0], sizes = [2, 128], strides = [1, 1]} : vector<2x512xf32> to vector<2x128xf32>
    %174 = arith.negf %173 : vector<2x128xf32>
    %175 = math.exp %174 : vector<2x128xf32>
    %cst_54 = arith.constant 1.000000e+00 : f32
    %176 = vector.broadcast %cst_54 : f32 to vector<2x128xf32>
    %177 = arith.addf %176, %175 : vector<2x128xf32>
    %178 = arith.divf %176, %177 : vector<2x128xf32>
    %179 = vector.extract_strided_slice %172 {offsets = [0, 128], sizes = [2, 128], strides = [1, 1]} : vector<2x512xf32> to vector<2x128xf32>
    %180 = arith.negf %179 : vector<2x128xf32>
    %181 = math.exp %180 : vector<2x128xf32>
    %cst_55 = arith.constant 1.000000e+00 : f32
    %182 = vector.broadcast %cst_55 : f32 to vector<2x128xf32>
    %183 = arith.addf %182, %181 : vector<2x128xf32>
    %184 = arith.divf %182, %183 : vector<2x128xf32>
    %185 = vector.extract_strided_slice %172 {offsets = [0, 256], sizes = [2, 128], strides = [1, 1]} : vector<2x512xf32> to vector<2x128xf32>
    %186 = math.tanh %185 : vector<2x128xf32>
    %187 = vector.extract_strided_slice %172 {offsets = [0, 384], sizes = [2, 128], strides = [1, 1]} : vector<2x512xf32> to vector<2x128xf32>
    %188 = arith.negf %187 : vector<2x128xf32>
    %189 = math.exp %188 : vector<2x128xf32>
    %cst_56 = arith.constant 1.000000e+00 : f32
    %190 = vector.broadcast %cst_56 : f32 to vector<2x128xf32>
    %191 = arith.addf %190, %189 : vector<2x128xf32>
    %192 = arith.divf %190, %191 : vector<2x128xf32>
    %193 = arith.mulf %184, %167 : vector<2x128xf32>
    %194 = arith.mulf %178, %186 : vector<2x128xf32>
    %195 = arith.addf %193, %194 : vector<2x128xf32>
    %196 = math.tanh %195 : vector<2x128xf32>
    %197 = arith.mulf %192, %196 : vector<2x128xf32>
    %c0_57 = arith.constant 0 : index
    %c0_58 = arith.constant 0 : index
    %198 = vector.load %arg6[%c0_57, %c0_58] : memref<128x512xf32, #tpu.memory_space<vmem>>, vector<128x512xf32>
    %cst_59 = arith.constant dense<0.000000e+00> : vector<2x512xf32>
    %199 = tpu.matmul %197, %198, %cst_59 {dimension_numbers = #tpu.dot_dimension_numbers<[1], [0], [0], [1], [0, 0, 1, 1], [], []>} : vector<2x128xf32>, vector<128x512xf32>, vector<2x512xf32> -> vector<2x512xf32>
    %200 = arith.addf %26, %199 : vector<2x512xf32>
    %201 = vector.extract_strided_slice %200 {offsets = [0, 0], sizes = [2, 128], strides = [1, 1]} : vector<2x512xf32> to vector<2x128xf32>
    %202 = arith.negf %201 : vector<2x128xf32>
    %203 = math.exp %202 : vector<2x128xf32>
    %cst_60 = arith.constant 1.000000e+00 : f32
    %204 = vector.broadcast %cst_60 : f32 to vector<2x128xf32>
    %205 = arith.addf %204, %203 : vector<2x128xf32>
    %206 = arith.divf %204, %205 : vector<2x128xf32>
    %207 = vector.extract_strided_slice %200 {offsets = [0, 128], sizes = [2, 128], strides = [1, 1]} : vector<2x512xf32> to vector<2x128xf32>
    %208 = arith.negf %207 : vector<2x128xf32>
    %209 = math.exp %208 : vector<2x128xf32>
    %cst_61 = arith.constant 1.000000e+00 : f32
    %210 = vector.broadcast %cst_61 : f32 to vector<2x128xf32>
    %211 = arith.addf %210, %209 : vector<2x128xf32>
    %212 = arith.divf %210, %211 : vector<2x128xf32>
    %213 = vector.extract_strided_slice %200 {offsets = [0, 256], sizes = [2, 128], strides = [1, 1]} : vector<2x512xf32> to vector<2x128xf32>
    %214 = math.tanh %213 : vector<2x128xf32>
    %215 = vector.extract_strided_slice %200 {offsets = [0, 384], sizes = [2, 128], strides = [1, 1]} : vector<2x512xf32> to vector<2x128xf32>
    %216 = arith.negf %215 : vector<2x128xf32>
    %217 = math.exp %216 : vector<2x128xf32>
    %cst_62 = arith.constant 1.000000e+00 : f32
    %218 = vector.broadcast %cst_62 : f32 to vector<2x128xf32>
    %219 = arith.addf %218, %217 : vector<2x128xf32>
    %220 = arith.divf %218, %219 : vector<2x128xf32>
    %221 = arith.mulf %212, %195 : vector<2x128xf32>
    %222 = arith.mulf %206, %214 : vector<2x128xf32>
    %223 = arith.addf %221, %222 : vector<2x128xf32>
    %224 = math.tanh %223 : vector<2x128xf32>
    %225 = arith.mulf %220, %224 : vector<2x128xf32>
    %c0_63 = arith.constant 0 : index
    %c0_64 = arith.constant 0 : index
    %226 = vector.load %arg6[%c0_63, %c0_64] : memref<128x512xf32, #tpu.memory_space<vmem>>, vector<128x512xf32>
    %cst_65 = arith.constant dense<0.000000e+00> : vector<2x512xf32>
    %227 = tpu.matmul %225, %226, %cst_65 {dimension_numbers = #tpu.dot_dimension_numbers<[1], [0], [0], [1], [0, 0, 1, 1], [], []>} : vector<2x128xf32>, vector<128x512xf32>, vector<2x512xf32> -> vector<2x512xf32>
    %228 = arith.addf %27, %227 : vector<2x512xf32>
    %229 = vector.extract_strided_slice %228 {offsets = [0, 0], sizes = [2, 128], strides = [1, 1]} : vector<2x512xf32> to vector<2x128xf32>
    %230 = arith.negf %229 : vector<2x128xf32>
    %231 = math.exp %230 : vector<2x128xf32>
    %cst_66 = arith.constant 1.000000e+00 : f32
    %232 = vector.broadcast %cst_66 : f32 to vector<2x128xf32>
    %233 = arith.addf %232, %231 : vector<2x128xf32>
    %234 = arith.divf %232, %233 : vector<2x128xf32>
    %235 = vector.extract_strided_slice %228 {offsets = [0, 128], sizes = [2, 128], strides = [1, 1]} : vector<2x512xf32> to vector<2x128xf32>
    %236 = arith.negf %235 : vector<2x128xf32>
    %237 = math.exp %236 : vector<2x128xf32>
    %cst_67 = arith.constant 1.000000e+00 : f32
    %238 = vector.broadcast %cst_67 : f32 to vector<2x128xf32>
    %239 = arith.addf %238, %237 : vector<2x128xf32>
    %240 = arith.divf %238, %239 : vector<2x128xf32>
    %241 = vector.extract_strided_slice %228 {offsets = [0, 256], sizes = [2, 128], strides = [1, 1]} : vector<2x512xf32> to vector<2x128xf32>
    %242 = math.tanh %241 : vector<2x128xf32>
    %243 = vector.extract_strided_slice %228 {offsets = [0, 384], sizes = [2, 128], strides = [1, 1]} : vector<2x512xf32> to vector<2x128xf32>
    %244 = arith.negf %243 : vector<2x128xf32>
    %245 = math.exp %244 : vector<2x128xf32>
    %cst_68 = arith.constant 1.000000e+00 : f32
    %246 = vector.broadcast %cst_68 : f32 to vector<2x128xf32>
    %247 = arith.addf %246, %245 : vector<2x128xf32>
    %248 = arith.divf %246, %247 : vector<2x128xf32>
    %249 = arith.mulf %240, %223 : vector<2x128xf32>
    %250 = arith.mulf %234, %242 : vector<2x128xf32>
    %251 = arith.addf %249, %250 : vector<2x128xf32>
    %252 = math.tanh %251 : vector<2x128xf32>
    %253 = arith.mulf %248, %252 : vector<2x128xf32>
    %254 = tpu.concatenate %57, %85, %113, %141, %169, %197, %225, %253 in 0 : vector<2x128xf32>, vector<2x128xf32>, vector<2x128xf32>, vector<2x128xf32>, vector<2x128xf32>, vector<2x128xf32>, vector<2x128xf32>, vector<2x128xf32> -> vector<16x128xf32>
    %c0_69 = arith.constant 0 : index
    %c0_70 = arith.constant 0 : index
    %255 = vector.load %arg8[%c0_69, %c0_70] : memref<128x256xf32, #tpu.memory_space<vmem>>, vector<128x256xf32>
    %cst_71 = arith.constant dense<0.000000e+00> : vector<16x256xf32>
    %256 = tpu.matmul %254, %255, %cst_71 {dimension_numbers = #tpu.dot_dimension_numbers<[1], [0], [0], [1], [0, 0, 1, 1], [], []>} : vector<16x128xf32>, vector<128x256xf32>, vector<16x256xf32> -> vector<16x256xf32>
    %c0_72 = arith.constant 0 : index
    %c0_73 = arith.constant 0 : index
    %257 = vector.load %arg9[%c0_72, %c0_73] : memref<1x256xf32, #tpu.memory_space<vmem>>, vector<1x256xf32>
    %258 = vector.broadcast %257 : vector<1x256xf32> to vector<16x256xf32>
    %259 = arith.addf %256, %258 : vector<16x256xf32>
    %cst_74 = arith.constant 0.000000e+00 : f32
    %260 = vector.broadcast %cst_74 : f32 to vector<16x256xf32>
    %261 = arith.maximumf %259, %260 : vector<16x256xf32>
    %c0_75 = arith.constant 0 : index
    %c0_76 = arith.constant 0 : index
    %262 = vector.load %arg10[%c0_75, %c0_76] : memref<256x128xf32, #tpu.memory_space<vmem>>, vector<256x128xf32>
    %cst_77 = arith.constant dense<0.000000e+00> : vector<16x128xf32>
    %263 = tpu.matmul %261, %262, %cst_77 {dimension_numbers = #tpu.dot_dimension_numbers<[1], [0], [0], [1], [0, 0, 1, 1], [], []>} : vector<16x256xf32>, vector<256x128xf32>, vector<16x128xf32> -> vector<16x128xf32>
    %c0_78 = arith.constant 0 : index
    %c0_79 = arith.constant 0 : index
    %264 = vector.load %arg11[%c0_78, %c0_79] : memref<1x128xf32, #tpu.memory_space<vmem>>, vector<1x128xf32>
    %265 = vector.broadcast %264 : vector<1x128xf32> to vector<16x128xf32>
    %266 = arith.addf %263, %265 : vector<16x128xf32>
    %c0_80 = arith.constant 0 : index
    %c0_81 = arith.constant 0 : index
    %267 = vector.load %arg14[%c0_80, %c0_81] : memref<16x128xf32, #tpu.memory_space<vmem>>, vector<16x128xf32>
    tpu.vector_store %arg14[%c0_80, %c0_81], %266 {strides = array<i32>} : memref<16x128xf32, #tpu.memory_space<vmem>>, vector<16x128xf32>,
    %c0_82 = arith.constant 0 : index
    %c0_83 = arith.constant 0 : index
    %268 = vector.load %arg15[%c0_82, %c0_83] : memref<2x128xf32, #tpu.memory_space<vmem>>, vector<2x128xf32>
    tpu.vector_store %arg15[%c0_82, %c0_83], %253 {strides = array<i32>} : memref<2x128xf32, #tpu.memory_space<vmem>>, vector<2x128xf32>,
    %c0_84 = arith.constant 0 : index
    %c0_85 = arith.constant 0 : index
    %269 = vector.load %arg16[%c0_84, %c0_85] : memref<2x128xf32, #tpu.memory_space<vmem>>, vector<2x128xf32>
    tpu.vector_store %arg16[%c0_84, %c0_85], %251 {strides = array<i32>} : memref<2x128xf32, #tpu.memory_space<vmem>>, vector<2x128xf32>,
    return
  }
}

</mosaic_0001>

<llo_original>
// kernel: dqn_lstm_latefusion.1
$region0: #{dqn_lstm_latefusion.1}
  #allocation0 [shape = 'u32[]', space=smem, size = 0x4, offset = 0x4, fixed_abs, tag = 'smem constant byte address 0x4 - core index']
  #allocation1 [shape = 'u32[144,128]{1,0:T(1,128)}', space=vmem, size = 0x12000, scoped, tag = 'internal scratch']
  %s0 = inlined_call_operand.vmem [shape: f32[16,133], index: 0, kind: input, shape index: {}]
  %s1 = inlined_call_operand.vmem [shape: f32[133,128], index: 1, kind: input, shape index: {}]
  %s2 = inlined_call_operand.vmem [shape: f32[1,128], index: 2, kind: input, shape index: {}]
  %s3 = inlined_call_operand.hbm [shape: f32[128,256], index: 3, kind: input, shape index: {}]
  %s4 = inlined_call_operand.vmem [shape: f32[1,256], index: 4, kind: input, shape index: {}]
  %s5 = inlined_call_operand.hbm [shape: f32[256,512], index: 5, kind: input, shape index: {}]
  %s6 = inlined_call_operand.hbm [shape: f32[128,512], index: 6, kind: input, shape index: {}]
  %s7 = inlined_call_operand.vmem [shape: f32[1,512], index: 7, kind: input, shape index: {}]
  %s8 = inlined_call_operand.hbm [shape: f32[128,256], index: 8, kind: input, shape index: {}]
  %s9 = inlined_call_operand.vmem [shape: f32[1,256], index: 9, kind: input, shape index: {}]
  %s10 = inlined_call_operand.hbm [shape: f32[256,128], index: 10, kind: input, shape index: {}]
  %s11 = inlined_call_operand.vmem [shape: f32[1,128], index: 11, kind: input, shape index: {}]
  %s12 = inlined_call_operand.vmem [shape: f32[2,128], index: 12, kind: input, shape index: {}]
  %s13 = inlined_call_operand.vmem [shape: f32[2,128], index: 13, kind: input, shape index: {}]
  %s14 = inlined_call_operand.vmem [shape: f32[16,128], index: 14, kind: output, shape index: {0}]
  %s15 = inlined_call_operand.vmem [shape: f32[2,128], index: 15, kind: output, shape index: {1}]
  %s16 = inlined_call_operand.vmem [shape: f32[2,128], index: 16, kind: output, shape index: {2}]
  %17 = xla_tuple %s14, %s15, %s16
  %s18 = sld [smem:[#allocation0]]
  $region102: #{dqn_lstm_latefusion.1} parent=0
    _
  %s20 = ssub.s32 1, %s18
  %s21 = scalar_select 0, %s20, %s18
  $region1: #{dqn_lstm_latefusion.1} parent=0
    #allocation2 [shape = 'u8[131072]{0}', space=vmem, size = 0x20000, scoped, tag = 'input window, operand 3, single buffered']
    #allocation3 [shape = 's32[1]{0}', space=sflag, size = 0x4, scoped, tag = 'scoped memory for dqn_lstm_latefusion.1']
    #allocation4 [shape = 'u8[524288]{0}', space=vmem, size = 0x80000, scoped, tag = 'input window, operand 5, single buffered']
    #allocation5 [shape = 's32[1]{0}', space=sflag, size = 0x4, scoped, tag = 'scoped memory for dqn_lstm_latefusion.1']
    #allocation6 [shape = 'u8[262144]{0}', space=vmem, size = 0x40000, scoped, tag = 'input window, operand 6, single buffered']
    #allocation7 [shape = 'u8[131072]{0}', space=vmem, size = 0x20000, scoped, tag = 'input window, operand 8, single buffered']
    #allocation8 [shape = 's32[1]{0}', space=sflag, size = 0x4, scoped, tag = 'scoped memory for dqn_lstm_latefusion.1']
    #allocation9 [shape = 'u8[131072]{0}', space=vmem, size = 0x20000, scoped, tag = 'input window, operand 10, single buffered']
    %22 = vsyncpa [#allocation3], 0
    %23 = vsyncpa [#allocation5], 0
    %24 = vsyncpa [#allocation8], 0
    // Predicated region
    $region2: #{dqn_lstm_latefusion.1} parent=1 // pred_check
      _
    $region3: #{dqn_lstm_latefusion.1} parent=1 // pred_check_branch
      %26 = sbr.rel (0) target = $region5
    $region4: #{dqn_lstm_latefusion.1} parent=1 // pred_region
      _
    $region5: #{dqn_lstm_latefusion.1} parent=1 // pred_fallthru
      _
    // Predicated region
    $region6: #{dqn_lstm_latefusion.1} parent=1 // pred_check
      _
    $region7: #{dqn_lstm_latefusion.1} parent=1 // pred_check_branch
      %28 = sbr.rel (0) target = $region9
    $region8: #{dqn_lstm_latefusion.1} parent=1 // pred_region
      _
    $region9: #{dqn_lstm_latefusion.1} parent=1 // pred_fallthru
      _
    // Predicated region
    $region10: #{dqn_lstm_latefusion.1} parent=1 // pred_check
      _
    $region11: #{dqn_lstm_latefusion.1} parent=1 // pred_check_branch
      %30 = sbr.rel (0) target = $region13
    $region12: #{dqn_lstm_latefusion.1} parent=1 // pred_region
      _
    $region13: #{dqn_lstm_latefusion.1} parent=1 // pred_fallthru
      _
    // Predicated region
    $region14: #{dqn_lstm_latefusion.1} parent=1 // pred_check
      _
    $region15: #{dqn_lstm_latefusion.1} parent=1 // pred_check_branch
      %32 = sbr.rel (0) target = $region17
    $region16: #{dqn_lstm_latefusion.1} parent=1 // pred_region
      %s34 = ssub.s32 4096, 4096
      %35 = vsyncadd [#allocation3], %s34
      %s36 = sshll.u32 [#allocation2], 4
      %s37 = int_to_ptr.vmem [resolvable:$true] %s36
      %42 = dma.hbm_to_vmem [thread:$0]  %s3, 4096, %s37, [#allocation3], 256, 256, 16
    $region17: #{dqn_lstm_latefusion.1} parent=1 // pred_fallthru
      _
    // Predicated region
    $region18: #{dqn_lstm_latefusion.1} parent=1 // pred_check
      _
    $region19: #{dqn_lstm_latefusion.1} parent=1 // pred_check_branch
      %44 = sbr.rel (0) target = $region21
    $region20: #{dqn_lstm_latefusion.1} parent=1 // pred_region
      _
    $region21: #{dqn_lstm_latefusion.1} parent=1 // pred_fallthru
      _
    // Predicated region
    $region22: #{dqn_lstm_latefusion.1} parent=1 // pred_check
      _
    $region23: #{dqn_lstm_latefusion.1} parent=1 // pred_check_branch
      %46 = sbr.rel (0) target = $region25
    $region24: #{dqn_lstm_latefusion.1} parent=1 // pred_region
      %s48 = ssub.s32 16384, 16384
      %49 = vsyncadd [#allocation5], %s48
      %s50 = sshll.u32 [#allocation4], 4
      %s51 = int_to_ptr.vmem [resolvable:$true] %s50
      %56 = dma.hbm_to_vmem [thread:$0]  %s5, 16384, %s51, [#allocation5], 512, 512, 32
    $region25: #{dqn_lstm_latefusion.1} parent=1 // pred_fallthru
      _
    // Predicated region
    $region26: #{dqn_lstm_latefusion.1} parent=1 // pred_check
      _
    $region27: #{dqn_lstm_latefusion.1} parent=1 // pred_check_branch
      %58 = sbr.rel (0) target = $region29
    $region28: #{dqn_lstm_latefusion.1} parent=1 // pred_region
      %s60 = ssub.s32 8192, 8192
      %61 = vsyncadd [#allocation5], %s60
      %s62 = sshll.u32 [#allocation6], 4
      %s63 = int_to_ptr.vmem [resolvable:$true] %s62
      %68 = dma.hbm_to_vmem [thread:$0]  %s6, 8192, %s63, [#allocation5], 512, 512, 32
    $region29: #{dqn_lstm_latefusion.1} parent=1 // pred_fallthru
      _
    // Predicated region
    $region30: #{dqn_lstm_latefusion.1} parent=1 // pred_check
      _
    $region31: #{dqn_lstm_latefusion.1} parent=1 // pred_check_branch
      %70 = sbr.rel (0) target = $region33
    $region32: #{dqn_lstm_latefusion.1} parent=1 // pred_region
      _
    $region33: #{dqn_lstm_latefusion.1} parent=1 // pred_fallthru
      _
    // Predicated region
    $region34: #{dqn_lstm_latefusion.1} parent=1 // pred_check
      _
    $region35: #{dqn_lstm_latefusion.1} parent=1 // pred_check_branch
      %72 = sbr.rel (0) target = $region37
    $region36: #{dqn_lstm_latefusion.1} parent=1 // pred_region
      %s74 = ssub.s32 4096, 4096
      %75 = vsyncadd [#allocation8], %s74
      %s76 = sshll.u32 [#allocation7], 4
      %s77 = int_to_ptr.vmem [resolvable:$true] %s76
      %82 = dma.hbm_to_vmem [thread:$0]  %s8, 4096, %s77, [#allocation8], 256, 256, 16
    $region37: #{dqn_lstm_latefusion.1} parent=1 // pred_fallthru
      _
    // Predicated region
    $region38: #{dqn_lstm_latefusion.1} parent=1 // pred_check
      _
    $region39: #{dqn_lstm_latefusion.1} parent=1 // pred_check_branch
      %84 = sbr.rel (0) target = $region41
    $region40: #{dqn_lstm_latefusion.1} parent=1 // pred_region
      _
    $region41: #{dqn_lstm_latefusion.1} parent=1 // pred_fallthru
      _
    // Predicated region
    $region42: #{dqn_lstm_latefusion.1} parent=1 // pred_check
      _
    $region43: #{dqn_lstm_latefusion.1} parent=1 // pred_check_branch
      %86 = sbr.rel (0) target = $region45
    $region44: #{dqn_lstm_latefusion.1} parent=1 // pred_region
      %s88 = ssub.s32 4096, 4096
      %89 = vsyncadd [#allocation8], %s88
      %s90 = sshll.u32 [#allocation9], 4
      %s91 = int_to_ptr.vmem [resolvable:$true] %s90
      %96 = dma.hbm_to_vmem [thread:$0]  %s10, 4096, %s91, [#allocation8], 128, 128, 8
    $region45: #{dqn_lstm_latefusion.1} parent=1 // pred_fallthru
      _
    // Predicated region
    $region46: #{dqn_lstm_latefusion.1} parent=1 // pred_check
      _
    $region47: #{dqn_lstm_latefusion.1} parent=1 // pred_check_branch
      %98 = sbr.rel (0) target = $region49
    $region48: #{dqn_lstm_latefusion.1} parent=1 // pred_region
      _
    $region49: #{dqn_lstm_latefusion.1} parent=1 // pred_fallthru
      _
    // Predicated region
    $region50: #{dqn_lstm_latefusion.1} parent=1 // pred_check
      _
    $region51: #{dqn_lstm_latefusion.1} parent=1 // pred_check_branch
      %100 = sbr.rel (0) target = $region53
    $region52: #{dqn_lstm_latefusion.1} parent=1 // pred_region
      _
    $region53: #{dqn_lstm_latefusion.1} parent=1 // pred_fallthru
      _
    // Predicated region
    $region54: #{dqn_lstm_latefusion.1} parent=1 // pred_check
      _
    $region55: #{dqn_lstm_latefusion.1} parent=1 // pred_check_branch
      %102 = sbr.rel (0) target = $region57
    $region56: #{dqn_lstm_latefusion.1} parent=1 // pred_region
      _
    $region57: #{dqn_lstm_latefusion.1} parent=1 // pred_fallthru
      _
    // Predicated region
    $region58: #{dqn_lstm_latefusion.1} parent=1 // pred_check
      _
    $region59: #{dqn_lstm_latefusion.1} parent=1 // pred_check_branch
      %104 = sbr.rel (0) target = $region61
    $region60: #{dqn_lstm_latefusion.1} parent=1 // pred_region
      %105 = dma.done [#allocation3], 4096
    $region61: #{dqn_lstm_latefusion.1} parent=1 // pred_fallthru
      _
    // Predicated region
    $region62: #{dqn_lstm_latefusion.1} parent=1 // pred_check
      _
    $region63: #{dqn_lstm_latefusion.1} parent=1 // pred_check_branch
      %107 = sbr.rel (0) target = $region65
    $region64: #{dqn_lstm_latefusion.1} parent=1 // pred_region
      %108 = dma.done [#allocation5], 16384
    $region65: #{dqn_lstm_latefusion.1} parent=1 // pred_fallthru
      _
    // Predicated region
    $region66: #{dqn_lstm_latefusion.1} parent=1 // pred_check
      _
    $region67: #{dqn_lstm_latefusion.1} parent=1 // pred_check_branch
      %110 = sbr.rel (0) target = $region69
    $region68: #{dqn_lstm_latefusion.1} parent=1 // pred_region
      %111 = dma.done [#allocation5], 8192
    $region69: #{dqn_lstm_latefusion.1} parent=1 // pred_fallthru
      _
    // Predicated region
    $region70: #{dqn_lstm_latefusion.1} parent=1 // pred_check
      _
    $region71: #{dqn_lstm_latefusion.1} parent=1 // pred_check_branch
      %113 = sbr.rel (0) target = $region73
    $region72: #{dqn_lstm_latefusion.1} parent=1 // pred_region
      %114 = dma.done [#allocation8], 4096
    $region73: #{dqn_lstm_latefusion.1} parent=1 // pred_fallthru
      _
    // Predicated region
    $region74: #{dqn_lstm_latefusion.1} parent=1 // pred_check
      _
    $region75: #{dqn_lstm_latefusion.1} parent=1 // pred_check_branch
      %116 = sbr.rel (0) target = $region77
    $region76: #{dqn_lstm_latefusion.1} parent=1 // pred_region
      %117 = dma.done [#allocation8], 4096
    $region77: #{dqn_lstm_latefusion.1} parent=1 // pred_fallthru
      _
    %v118 = vld [vmem:[%s0] sm:$0xff]
    %v119 = vld [vmem:[%s0 + $0x8] sm:$0xff]
    %v120 = vld [vmem:[%s0 + $0x10] sm:$0xff]
    %v121 = vld [vmem:[%s0 + $0x18] sm:$0xff]
    %v122 = vld [vmem:[%s1] sm:$0xff]
    %v123 = vld [vmem:[%s1 + $0x8] sm:$0xff]
    %v124 = vld [vmem:[%s1 + $0x10] sm:$0xff]
    %v125 = vld [vmem:[%s1 + $0x18] sm:$0xff]
    %v126 = vld [vmem:[%s1 + $0x20] sm:$0xff]
    %v127 = vld [vmem:[%s1 + $0x28] sm:$0xff]
    %v128 = vld [vmem:[%s1 + $0x30] sm:$0xff]
    %v129 = vld [vmem:[%s1 + $0x38] sm:$0xff]
    %v130 = vld [vmem:[%s1 + $0x40] sm:$0xff]
    %v131 = vld [vmem:[%s1 + $0x48] sm:$0xff]
    %v132 = vld [vmem:[%s1 + $0x50] sm:$0xff]
    %v133 = vld [vmem:[%s1 + $0x58] sm:$0xff]
    %v134 = vld [vmem:[%s1 + $0x60] sm:$0xff]
    %v135 = vld [vmem:[%s1 + $0x68] sm:$0xff]
    %v136 = vld [vmem:[%s1 + $0x70] sm:$0xff]
    %v137 = vld [vmem:[%s1 + $0x78] sm:$0xff]
    %v138 = vld [vmem:[%s1 + $0x80] sm:$0x1f]
    %v139 = vld [vmem:[%s2] sm:$0x1]
    %v141 = vlaneseq
    %v142 = vshrl.u32 %v141, 7
    %v143 = vsub.s32 0, %v142
    %v144 = vrot.slane %v139, %v143
    %vm146 = vcmask 39936
    %v148 = vsel %vm146, %v119, 0
    %v151 = vsel %vm146, %v121, 0
    %vm153 = vcmask 1044480
    %v155 = vsel %vm153, %v138, 0
    %157 = vmatprep.subr.mxu0 0.0
    %158 = vmatpush1.msra.mxu0 %v122
    %159 = vmatprep.subr.mxu0 0.0
    %160 = vmatpush1.msra.mxu0 %v123
    %161 = vmatprep.subr.mxu0 0.0
    %162 = vmatpush1.msra.mxu0 %v124
    %163 = vmatprep.subr.mxu0 0.0
    %164 = vmatpush1.msra.mxu0 %v125
    %165 = vmatprep.subr.mxu0 0.0
    %166 = vmatpush1.msra.mxu0 %v126
    %167 = vmatprep.subr.mxu0 0.0
    %168 = vmatpush1.msra.mxu0 %v127
    %169 = vmatprep.subr.mxu0 0.0
    %170 = vmatpush1.msra.mxu0 %v128
    %171 = vmatprep.subr.mxu0 0.0
    %172 = vmatpush1.msra.mxu0 %v129
    %173 = vmatprep.subr.mxu0 0.0
    %174 = vmatpush1.msra.mxu0 %v130
    %175 = vmatprep.subr.mxu0 0.0
    %176 = vmatpush1.msra.mxu0 %v131
    %177 = vmatprep.subr.mxu0 0.0
    %178 = vmatpush1.msra.mxu0 %v132
    %179 = vmatprep.subr.mxu0 0.0
    %180 = vmatpush1.msra.mxu0 %v133
    %181 = vmatprep.subr.mxu0 0.0
    %182 = vmatpush1.msra.mxu0 %v134
    %183 = vmatprep.subr.mxu0 0.0
    %184 = vmatpush1.msra.mxu0 %v135
    %185 = vmatprep.subr.mxu0 0.0
    %186 = vmatpush1.msra.mxu0 %v136
    %187 = vmatprep.subr.mxu0 0.0
    %188 = vmatpush1.msra.mxu0 %v137
    %189 = vmatprep.subr.mxu0 0.0
    %190 = vmatpush1.msra.mxu0 %v155
    %191 = vmatprep.subr.mxu0 0.0
    %192 = vmatpush1.msra.mxu0 0.0
    %193 = vmatprep.subr.mxu0 0.0
    %194 = vmatpush1.msra.mxu0 0.0
    %195 = vmatprep.subr.mxu0 0.0
    %196 = vmatpush1.msra.mxu0 0.0
    %197 = vmatprep.subr.mxu0 0.0
    %198 = vmatpush1.msra.mxu0 0.0
    %199 = vmatprep.subr.mxu0 0.0
    %200 = vmatpush1.msra.mxu0 0.0
    %201 = vmatprep.subr.mxu0 0.0
    %202 = vmatpush1.msra.mxu0 0.0
    %203 = vmatprep.subr.mxu0 0.0
    %204 = vmatpush1.msra.mxu0 0.0
    %205 = vmatprep.subr.mxu0 0.0
    %206 = vmatpush1.msra.mxu0 0.0
    %207 = vmatprep.subr.mxu0 0.0
    %208 = vmatpush1.msra.mxu0 0.0
    %209 = vmatprep.subr.mxu0 0.0
    %210 = vmatpush1.msra.mxu0 0.0
    %211 = vmatprep.subr.mxu0 0.0
    %212 = vmatpush1.msra.mxu0 0.0
    %213 = vmatprep.subr.mxu0 0.0
    %214 = vmatpush1.msra.mxu0 0.0
    %215 = vmatprep.subr.mxu0 0.0
    %216 = vmatpush1.msra.mxu0 0.0
    %217 = vmatprep.subr.mxu0 0.0
    %218 = vmatpush1.msra.mxu0 0.0
    %219 = vmatprep.subr.mxu0 0.0
    %220 = vmatpush1.msra.mxu0 0.0
    %221 = vmatprep.mubr.f32.mxu0 %v148
    %222 = vmatmul.mubr.f32.gmra.mrb[0].mxu0 %v118
    %v223 = vpop.f32.mrb[0].mxu0
    %v224 = vadd.f32 %v144, %v223
    %v225 = vpop.f32.mrb[0].mxu0
    %226 = vmatprep.mubr.f32.mxu0 %v151
    %227 = vmatmul.mubr.f32.gmra.mrb[0].mxu0 %v120
    %v228 = vpop.f32.mrb[0].mxu0
    %v229 = vadd.f32 %v144, %v228
    %v230 = vpop.f32.mrb[0].mxu0
    %231 = vdwg.mxu0
    %v232 = vmax.f32 %v224, 0.0
    %v233 = vmax.f32 %v229, 0.0
    %v234 = vld [vmem:[#allocation2] sm:$0xff]
    %v235 = vld [vmem:[#allocation2 + $0x8] sm:$0xff]
    %v236 = vld [vmem:[#allocation2 + $0x10] sm:$0xff]
    %v237 = vld [vmem:[#allocation2 + $0x18] sm:$0xff]
    %v238 = vld [vmem:[#allocation2 + $0x20] sm:$0xff]
    %v239 = vld [vmem:[#allocation2 + $0x28] sm:$0xff]
    %v240 = vld [vmem:[#allocation2 + $0x30] sm:$0xff]
    %v241 = vld [vmem:[#allocation2 + $0x38] sm:$0xff]
    %v242 = vld [vmem:[#allocation2 + $0x40] sm:$0xff]
    %v243 = vld [vmem:[#allocation2 + $0x48] sm:$0xff]
    %v244 = vld [vmem:[#allocation2 + $0x50] sm:$0xff]
    %v245 = vld [vmem:[#allocation2 + $0x58] sm:$0xff]
    %v246 = vld [vmem:[#allocation2 + $0x60] sm:$0xff]
    %v247 = vld [vmem:[#allocation2 + $0x68] sm:$0xff]
    %v248 = vld [vmem:[#allocation2 + $0x70] sm:$0xff]
    %v249 = vld [vmem:[#allocation2 + $0x78] sm:$0xff]
    %v250 = vld [vmem:[#allocation2 + $0x80] sm:$0xff]
    %v251 = vld [vmem:[#allocation2 + $0x88] sm:$0xff]
    %v252 = vld [vmem:[#allocation2 + $0x90] sm:$0xff]
    %v253 = vld [vmem:[#allocation2 + $0x98] sm:$0xff]
    %v254 = vld [vmem:[#allocation2 + $0xa0] sm:$0xff]
    %v255 = vld [vmem:[#allocation2 + $0xa8] sm:$0xff]
    %v256 = vld [vmem:[#allocation2 + $0xb0] sm:$0xff]
    %v257 = vld [vmem:[#allocation2 + $0xb8] sm:$0xff]
    %v258 = vld [vmem:[#allocation2 + $0xc0] sm:$0xff]
    %v259 = vld [vmem:[#allocation2 + $0xc8] sm:$0xff]
    %v260 = vld [vmem:[#allocation2 + $0xd0] sm:$0xff]
    %v261 = vld [vmem:[#allocation2 + $0xd8] sm:$0xff]
    %v262 = vld [vmem:[#allocation2 + $0xe0] sm:$0xff]
    %v263 = vld [vmem:[#allocation2 + $0xe8] sm:$0xff]
    %v264 = vld [vmem:[#allocation2 + $0xf0] sm:$0xff]
    %v265 = vld [vmem:[#allocation2 + $0xf8] sm:$0xff]
    %v266 = vld [vmem:[%s4] sm:$0x3]
    %v268 = vlaneseq
    %v269 = vshrl.u32 %v268, 7
    %v270 = vsub.s32 0, %v269
    %v271 = vrot.slane %v266, %v270
    %v272 = vlaneseq
    %v273 = vshrl.u32 %v272, 7
    %v274 = vsub.s32 1, %v273
    %v275 = vrot.slane %v266, %v274
    %278 = vmatprep.subr.mxu0 %v235
    %279 = vmatpush1.msra.mxu0 %v234
    %280 = vmatprep.subr.mxu0 %v237
    %281 = vmatpush1.msra.mxu0 %v236
    %282 = vmatprep.subr.mxu0 %v239
    %283 = vmatpush1.msra.mxu0 %v238
    %284 = vmatprep.subr.mxu0 %v241
    %285 = vmatpush1.msra.mxu0 %v240
    %286 = vmatprep.subr.mxu0 %v243
    %287 = vmatpush1.msra.mxu0 %v242
    %288 = vmatprep.subr.mxu0 %v245
    %289 = vmatpush1.msra.mxu0 %v244
    %290 = vmatprep.subr.mxu0 %v247
    %291 = vmatpush1.msra.mxu0 %v246
    %292 = vmatprep.subr.mxu0 %v249
    %293 = vmatpush1.msra.mxu0 %v248
    %294 = vmatprep.subr.mxu0 %v251
    %295 = vmatpush1.msra.mxu0 %v250
    %296 = vmatprep.subr.mxu0 %v253
    %297 = vmatpush1.msra.mxu0 %v252
    %298 = vmatprep.subr.mxu0 %v255
    %299 = vmatpush1.msra.mxu0 %v254
    %300 = vmatprep.subr.mxu0 %v257
    %301 = vmatpush1.msra.mxu0 %v256
    %302 = vmatprep.subr.mxu0 %v259
    %303 = vmatpush1.msra.mxu0 %v258
    %304 = vmatprep.subr.mxu0 %v261
    %305 = vmatpush1.msra.mxu0 %v260
    %306 = vmatprep.subr.mxu0 %v263
    %307 = vmatpush1.msra.mxu0 %v262
    %308 = vmatprep.subr.mxu0 %v265
    %309 = vmatpush1.msra.mxu0 %v264
    %310 = vmatprep.subr.mxu0 0.0
    %311 = vmatpush1.msra.mxu0 0.0
    %312 = vmatprep.subr.mxu0 0.0
    %313 = vmatpush1.msra.mxu0 0.0
    %314 = vmatprep.subr.mxu0 0.0
    %315 = vmatpush1.msra.mxu0 0.0
    %316 = vmatprep.subr.mxu0 0.0
    %317 = vmatpush1.msra.mxu0 0.0
    %318 = vmatprep.subr.mxu0 0.0
    %319 = vmatpush1.msra.mxu0 0.0
    %320 = vmatprep.subr.mxu0 0.0
    %321 = vmatpush1.msra.mxu0 0.0
    %322 = vmatprep.subr.mxu0 0.0
    %323 = vmatpush1.msra.mxu0 0.0
    %324 = vmatprep.subr.mxu0 0.0
    %325 = vmatpush1.msra.mxu0 0.0
    %326 = vmatprep.subr.mxu0 0.0
    %327 = vmatpush1.msra.mxu0 0.0
    %328 = vmatprep.subr.mxu0 0.0
    %329 = vmatpush1.msra.mxu0 0.0
    %330 = vmatprep.subr.mxu0 0.0
    %331 = vmatpush1.msra.mxu0 0.0
    %332 = vmatprep.subr.mxu0 0.0
    %333 = vmatpush1.msra.mxu0 0.0
    %334 = vmatprep.subr.mxu0 0.0
    %335 = vmatpush1.msra.mxu0 0.0
    %336 = vmatprep.subr.mxu0 0.0
    %337 = vmatpush1.msra.mxu0 0.0
    %338 = vmatprep.subr.mxu0 0.0
    %339 = vmatpush1.msra.mxu0 0.0
    %340 = vmatprep.subr.mxu0 0.0
    %341 = vmatpush1.msra.mxu0 0.0
    %342 = vmatprep.mubr.f32.mxu0 0.0
    %343 = vmatmul.mubr.f32.gmra.mrb[0].mxu0 %v232
    %v344 = vpop.f32.mrb[0].mxu0
    %v345 = vadd.f32 %v271, %v344
    %v346 = vpop.f32.mrb[0].mxu0
    %v347 = vadd.f32 %v275, %v346
    %348 = vmatprep.mubr.f32.mxu0 0.0
    %349 = vmatmul.mubr.f32.gmra.mrb[0].mxu0 %v233
    %v350 = vpop.f32.mrb[0].mxu0
    %v351 = vadd.f32 %v271, %v350
    %v352 = vpop.f32.mrb[0].mxu0
    %v353 = vadd.f32 %v275, %v352
    %354 = vdwg.mxu0
    %v355 = vmax.f32 %v345, 0.0
    %v356 = vmax.f32 %v347, 0.0
    %v357 = vmax.f32 %v351, 0.0
    %v358 = vmax.f32 %v353, 0.0
    %v359 = vld [vmem:[#allocation4] sm:$0xff]
    %v360 = vld [vmem:[#allocation4 + $0x8] sm:$0xff]
    %v361 = vld [vmem:[#allocation4 + $0x10] sm:$0xff]
    %v362 = vld [vmem:[#allocation4 + $0x18] sm:$0xff]
    %v363 = vld [vmem:[#allocation4 + $0x20] sm:$0xff]
    %v364 = vld [vmem:[#allocation4 + $0x28] sm:$0xff]
    %v365 = vld [vmem:[#allocation4 + $0x30] sm:$0xff]
    %v366 = vld [vmem:[#allocation4 + $0x38] sm:$0xff]
    %v367 = vld [vmem:[#allocation4 + $0x40] sm:$0xff]
    %v368 = vld [vmem:[#allocation4 + $0x48] sm:$0xff]
    %v369 = vld [vmem:[#allocation4 + $0x50] sm:$0xff]
    %v370 = vld [vmem:[#allocation4 + $0x58] sm:$0xff]
    %v371 = vld [vmem:[#allocation4 + $0x60] sm:$0xff]
    %v372 = vld [vmem:[#allocation4 + $0x68] sm:$0xff]
    %v373 = vld [vmem:[#allocation4 + $0x70] sm:$0xff]
    %v374 = vld [vmem:[#allocation4 + $0x78] sm:$0xff]
    %v375 = vld [vmem:[#allocation4 + $0x80] sm:$0xff]
    %v376 = vld [vmem:[#allocation4 + $0x88] sm:$0xff]
    %v377 = vld [vmem:[#allocation4 + $0x90] sm:$0xff]
    %v378 = vld [vmem:[#allocation4 + $0x98] sm:$0xff]
    %v379 = vld [vmem:[#allocation4 + $0xa0] sm:$0xff]
    %v380 = vld [vmem:[#allocation4 + $0xa8] sm:$0xff]
    %v381 = vld [vmem:[#allocation4 + $0xb0] sm:$0xff]
    %v382 = vld [vmem:[#allocation4 + $0xb8] sm:$0xff]
    %v383 = vld [vmem:[#allocation4 + $0xc0] sm:$0xff]
    %v384 = vld [vmem:[#allocation4 + $0xc8] sm:$0xff]
    %v385 = vld [vmem:[#allocation4 + $0xd0] sm:$0xff]
    %v386 = vld [vmem:[#allocation4 + $0xd8] sm:$0xff]
    %v387 = vld [vmem:[#allocation4 + $0xe0] sm:$0xff]
    %v388 = vld [vmem:[#allocation4 + $0xe8] sm:$0xff]
    %v389 = vld [vmem:[#allocation4 + $0xf0] sm:$0xff]
    %v390 = vld [vmem:[#allocation4 + $0xf8] sm:$0xff]
    %v391 = vld [vmem:[#allocation4 + $0x100] sm:$0xff]
    %v392 = vld [vmem:[#allocation4 + $0x108] sm:$0xff]
    %v393 = vld [vmem:[#allocation4 + $0x110] sm:$0xff]
    %v394 = vld [vmem:[#allocation4 + $0x118] sm:$0xff]
    %v395 = vld [vmem:[#allocation4 + $0x120] sm:$0xff]
    %v396 = vld [vmem:[#allocation4 + $0x128] sm:$0xff]
    %v397 = vld [vmem:[#allocation4 + $0x130] sm:$0xff]
    %v398 = vld [vmem:[#allocation4 + $0x138] sm:$0xff]
    %v399 = vld [vmem:[#allocation4 + $0x140] sm:$0xff]
    %v400 = vld [vmem:[#allocation4 + $0x148] sm:$0xff]
    %v401 = vld [vmem:[#allocation4 + $0x150] sm:$0xff]
    %v402 = vld [vmem:[#allocation4 + $0x158] sm:$0xff]
    %v403 = vld [vmem:[#allocation4 + $0x160] sm:$0xff]
    %v404 = vld [vmem:[#allocation4 + $0x168] sm:$0xff]
    %v405 = vld [vmem:[#allocation4 + $0x170] sm:$0xff]
    %v406 = vld [vmem:[#allocation4 + $0x178] sm:$0xff]
    %v407 = vld [vmem:[#allocation4 + $0x180] sm:$0xff]
    %v408 = vld [vmem:[#allocation4 + $0x188] sm:$0xff]
    %v409 = vld [vmem:[#allocation4 + $0x190] sm:$0xff]
    %v410 = vld [vmem:[#allocation4 + $0x198] sm:$0xff]
    %v411 = vld [vmem:[#allocation4 + $0x1a0] sm:$0xff]
    %v412 = vld [vmem:[#allocation4 + $0x1a8] sm:$0xff]
    %v413 = vld [vmem:[#allocation4 + $0x1b0] sm:$0xff]
    %v414 = vld [vmem:[#allocation4 + $0x1b8] sm:$0xff]
    %v415 = vld [vmem:[#allocation4 + $0x1c0] sm:$0xff]
    %v416 = vld [vmem:[#allocation4 + $0x1c8] sm:$0xff]
    %v417 = vld [vmem:[#allocation4 + $0x1d0] sm:$0xff]
    %v418 = vld [vmem:[#allocation4 + $0x1d8] sm:$0xff]
    %v419 = vld [vmem:[#allocation4 + $0x1e0] sm:$0xff]
    %v420 = vld [vmem:[#allocation4 + $0x1e8] sm:$0xff]
    %v421 = vld [vmem:[#allocation4 + $0x1f0] sm:$0xff]
    %v422 = vld [vmem:[#allocation4 + $0x1f8] sm:$0xff]
    %v423 = vld [vmem:[#allocation4 + $0x200] sm:$0xff]
    %v424 = vld [vmem:[#allocation4 + $0x208] sm:$0xff]
    %v425 = vld [vmem:[#allocation4 + $0x210] sm:$0xff]
    %v426 = vld [vmem:[#allocation4 + $0x218] sm:$0xff]
    %v427 = vld [vmem:[#allocation4 + $0x220] sm:$0xff]
    %v428 = vld [vmem:[#allocation4 + $0x228] sm:$0xff]
    %v429 = vld [vmem:[#allocation4 + $0x230] sm:$0xff]
    %v430 = vld [vmem:[#allocation4 + $0x238] sm:$0xff]
    %v431 = vld [vmem:[#allocation4 + $0x240] sm:$0xff]
    %v432 = vld [vmem:[#allocation4 + $0x248] sm:$0xff]
    %v433 = vld [vmem:[#allocation4 + $0x250] sm:$0xff]
    %v434 = vld [vmem:[#allocation4 + $0x258] sm:$0xff]
    %v435 = vld [vmem:[#allocation4 + $0x260] sm:$0xff]
    %v436 = vld [vmem:[#allocation4 + $0x268] sm:$0xff]
    %v437 = vld [vmem:[#allocation4 + $0x270] sm:$0xff]
    %v438 = vld [vmem:[#allocation4 + $0x278] sm:$0xff]
    %v439 = vld [vmem:[#allocation4 + $0x280] sm:$0xff]
    %v440 = vld [vmem:[#allocation4 + $0x288] sm:$0xff]
    %v441 = vld [vmem:[#allocation4 + $0x290] sm:$0xff]
    %v442 = vld [vmem:[#allocation4 + $0x298] sm:$0xff]
    %v443 = vld [vmem:[#allocation4 + $0x2a0] sm:$0xff]
    %v444 = vld [vmem:[#allocation4 + $0x2a8] sm:$0xff]
    %v445 = vld [vmem:[#allocation4 + $0x2b0] sm:$0xff]
    %v446 = vld [vmem:[#allocation4 + $0x2b8] sm:$0xff]
    %v447 = vld [vmem:[#allocation4 + $0x2c0] sm:$0xff]
    %v448 = vld [vmem:[#allocation4 + $0x2c8] sm:$0xff]
    %v449 = vld [vmem:[#allocation4 + $0x2d0] sm:$0xff]
    %v450 = vld [vmem:[#allocation4 + $0x2d8] sm:$0xff]
    %v451 = vld [vmem:[#allocation4 + $0x2e0] sm:$0xff]
    %v452 = vld [vmem:[#allocation4 + $0x2e8] sm:$0xff]
    %v453 = vld [vmem:[#allocation4 + $0x2f0] sm:$0xff]
    %v454 = vld [vmem:[#allocation4 + $0x2f8] sm:$0xff]
    %v455 = vld [vmem:[#allocation4 + $0x300] sm:$0xff]
    %v456 = vld [vmem:[#allocation4 + $0x308] sm:$0xff]
    %v457 = vld [vmem:[#allocation4 + $0x310] sm:$0xff]
    %v458 = vld [vmem:[#allocation4 + $0x318] sm:$0xff]
    %v459 = vld [vmem:[#allocation4 + $0x320] sm:$0xff]
    %v460 = vld [vmem:[#allocation4 + $0x328] sm:$0xff]
    %v461 = vld [vmem:[#allocation4 + $0x330] sm:$0xff]
    %v462 = vld [vmem:[#allocation4 + $0x338] sm:$0xff]
    %v463 = vld [vmem:[#allocation4 + $0x340] sm:$0xff]
    %v464 = vld [vmem:[#allocation4 + $0x348] sm:$0xff]
    %v465 = vld [vmem:[#allocation4 + $0x350] sm:$0xff]
    %v466 = vld [vmem:[#allocation4 + $0x358] sm:$0xff]
    %v467 = vld [vmem:[#allocation4 + $0x360] sm:$0xff]
    %v468 = vld [vmem:[#allocation4 + $0x368] sm:$0xff]
    %v469 = vld [vmem:[#allocation4 + $0x370] sm:$0xff]
    %v470 = vld [vmem:[#allocation4 + $0x378] sm:$0xff]
    %v471 = vld [vmem:[#allocation4 + $0x380] sm:$0xff]
    %v472 = vld [vmem:[#allocation4 + $0x388] sm:$0xff]
    %v473 = vld [vmem:[#allocation4 + $0x390] sm:$0xff]
    %v474 = vld [vmem:[#allocation4 + $0x398] sm:$0xff]
    %v475 = vld [vmem:[#allocation4 + $0x3a0] sm:$0xff]
    %v476 = vld [vmem:[#allocation4 + $0x3a8] sm:$0xff]
    %v477 = vld [vmem:[#allocation4 + $0x3b0] sm:$0xff]
    %v478 = vld [vmem:[#allocation4 + $0x3b8] sm:$0xff]
    %v479 = vld [vmem:[#allocation4 + $0x3c0] sm:$0xff]
    %v480 = vld [vmem:[#allocation4 + $0x3c8] sm:$0xff]
    %v481 = vld [vmem:[#allocation4 + $0x3d0] sm:$0xff]
    %v482 = vld [vmem:[#allocation4 + $0x3d8] sm:$0xff]
    %v483 = vld [vmem:[#allocation4 + $0x3e0] sm:$0xff]
    %v484 = vld [vmem:[#allocation4 + $0x3e8] sm:$0xff]
    %v485 = vld [vmem:[#allocation4 + $0x3f0] sm:$0xff]
    %v486 = vld [vmem:[#allocation4 + $0x3f8] sm:$0xff]
    %v487 = vld [vmem:[%s7] sm:$0xf]
    %v489 = vlaneseq
    %v490 = vshrl.u32 %v489, 7
    %v491 = vsub.s32 0, %v490
    %v492 = vrot.slane %v487, %v491
    %v493 = vlaneseq
    %v494 = vshrl.u32 %v493, 7
    %v495 = vsub.s32 1, %v494
    %v496 = vrot.slane %v487, %v495
    %v497 = vlaneseq
    %v498 = vshrl.u32 %v497, 7
    %v499 = vsub.s32 2, %v498
    %v500 = vrot.slane %v487, %v499
    %v501 = vlaneseq
    %v502 = vshrl.u32 %v501, 7
    %v503 = vsub.s32 3, %v502
    %v504 = vrot.slane %v487, %v503
    %509 = vmatprep.subr.mxu0 %v360
    %510 = vmatpush1.msra.mxu0 %v359
    %511 = vmatprep.subr.mxu0 %v364
    %512 = vmatpush1.msra.mxu0 %v363
    %513 = vmatprep.subr.mxu0 %v368
    %514 = vmatpush1.msra.mxu0 %v367
    %515 = vmatprep.subr.mxu0 %v372
    %516 = vmatpush1.msra.mxu0 %v371
    %517 = vmatprep.subr.mxu0 %v376
    %518 = vmatpush1.msra.mxu0 %v375
    %519 = vmatprep.subr.mxu0 %v380
    %520 = vmatpush1.msra.mxu0 %v379
    %521 = vmatprep.subr.mxu0 %v384
    %522 = vmatpush1.msra.mxu0 %v383
    %523 = vmatprep.subr.mxu0 %v388
    %524 = vmatpush1.msra.mxu0 %v387
    %525 = vmatprep.subr.mxu0 %v392
    %526 = vmatpush1.msra.mxu0 %v391
    %527 = vmatprep.subr.mxu0 %v396
    %528 = vmatpush1.msra.mxu0 %v395
    %529 = vmatprep.subr.mxu0 %v400
    %530 = vmatpush1.msra.mxu0 %v399
    %531 = vmatprep.subr.mxu0 %v404
    %532 = vmatpush1.msra.mxu0 %v403
    %533 = vmatprep.subr.mxu0 %v408
    %534 = vmatpush1.msra.mxu0 %v407
    %535 = vmatprep.subr.mxu0 %v412
    %536 = vmatpush1.msra.mxu0 %v411
    %537 = vmatprep.subr.mxu0 %v416
    %538 = vmatpush1.msra.mxu0 %v415
    %539 = vmatprep.subr.mxu0 %v420
    %540 = vmatpush1.msra.mxu0 %v419
    %541 = vmatprep.subr.mxu0 %v424
    %542 = vmatpush1.msra.mxu0 %v423
    %543 = vmatprep.subr.mxu0 %v428
    %544 = vmatpush1.msra.mxu0 %v427
    %545 = vmatprep.subr.mxu0 %v432
    %546 = vmatpush1.msra.mxu0 %v431
    %547 = vmatprep.subr.mxu0 %v436
    %548 = vmatpush1.msra.mxu0 %v435
    %549 = vmatprep.subr.mxu0 %v440
    %550 = vmatpush1.msra.mxu0 %v439
    %551 = vmatprep.subr.mxu0 %v444
    %552 = vmatpush1.msra.mxu0 %v443
    %553 = vmatprep.subr.mxu0 %v448
    %554 = vmatpush1.msra.mxu0 %v447
    %555 = vmatprep.subr.mxu0 %v452
    %556 = vmatpush1.msra.mxu0 %v451
    %557 = vmatprep.subr.mxu0 %v456
    %558 = vmatpush1.msra.mxu0 %v455
    %559 = vmatprep.subr.mxu0 %v460
    %560 = vmatpush1.msra.mxu0 %v459
    %561 = vmatprep.subr.mxu0 %v464
    %562 = vmatpush1.msra.mxu0 %v463
    %563 = vmatprep.subr.mxu0 %v468
    %564 = vmatpush1.msra.mxu0 %v467
    %565 = vmatprep.subr.mxu0 %v472
    %566 = vmatpush1.msra.mxu0 %v471
    %567 = vmatprep.subr.mxu0 %v476
    %568 = vmatpush1.msra.mxu0 %v475
    %569 = vmatprep.subr.mxu0 %v480
    %570 = vmatpush1.msra.mxu0 %v479
    %571 = vmatprep.subr.mxu0 %v484
    %572 = vmatpush1.msra.mxu0 %v483
    %573 = vmatprep.mubr.f32.mxu0 %v356
    %574 = vmatmul.mubr.f32.gmra.mrb[0].mxu0 %v355
    %v575 = vpop.f32.mrb[0].mxu0
    %v576 = vadd.f32 %v492, %v575
    %v577 = vpop.f32.mrb[0].mxu0
    %v578 = vadd.f32 %v496, %v577
    %579 = vmatprep.mubr.f32.mxu0 %v358
    %580 = vmatmul.mubr.f32.gmra.mrb[0].mxu0 %v357
    %v581 = vpop.f32.mrb[0].mxu0
    %v582 = vadd.f32 %v492, %v581
    %v583 = vpop.f32.mrb[0].mxu0
    %v584 = vadd.f32 %v496, %v583
    %585 = vdwg.mxu0
    %586 = vmatprep.subr.mxu0 %v362
    %587 = vmatpush1.msra.mxu0 %v361
    %588 = vmatprep.subr.mxu0 %v366
    %589 = vmatpush1.msra.mxu0 %v365
    %590 = vmatprep.subr.mxu0 %v370
    %591 = vmatpush1.msra.mxu0 %v369
    %592 = vmatprep.subr.mxu0 %v374
    %593 = vmatpush1.msra.mxu0 %v373
    %594 = vmatprep.subr.mxu0 %v378
    %595 = vmatpush1.msra.mxu0 %v377
    %596 = vmatprep.subr.mxu0 %v382
    %597 = vmatpush1.msra.mxu0 %v381
    %598 = vmatprep.subr.mxu0 %v386
    %599 = vmatpush1.msra.mxu0 %v385
    %600 = vmatprep.subr.mxu0 %v390
    %601 = vmatpush1.msra.mxu0 %v389
    %602 = vmatprep.subr.mxu0 %v394
    %603 = vmatpush1.msra.mxu0 %v393
    %604 = vmatprep.subr.mxu0 %v398
    %605 = vmatpush1.msra.mxu0 %v397
    %606 = vmatprep.subr.mxu0 %v402
    %607 = vmatpush1.msra.mxu0 %v401
    %608 = vmatprep.subr.mxu0 %v406
    %609 = vmatpush1.msra.mxu0 %v405
    %610 = vmatprep.subr.mxu0 %v410
    %611 = vmatpush1.msra.mxu0 %v409
    %612 = vmatprep.subr.mxu0 %v414
    %613 = vmatpush1.msra.mxu0 %v413
    %614 = vmatprep.subr.mxu0 %v418
    %615 = vmatpush1.msra.mxu0 %v417
    %616 = vmatprep.subr.mxu0 %v422
    %617 = vmatpush1.msra.mxu0 %v421
    %618 = vmatprep.subr.mxu0 %v426
    %619 = vmatpush1.msra.mxu0 %v425
    %620 = vmatprep.subr.mxu0 %v430
    %621 = vmatpush1.msra.mxu0 %v429
    %622 = vmatprep.subr.mxu0 %v434
    %623 = vmatpush1.msra.mxu0 %v433
    %624 = vmatprep.subr.mxu0 %v438
    %625 = vmatpush1.msra.mxu0 %v437
    %626 = vmatprep.subr.mxu0 %v442
    %627 = vmatpush1.msra.mxu0 %v441
    %628 = vmatprep.subr.mxu0 %v446
    %629 = vmatpush1.msra.mxu0 %v445
    %630 = vmatprep.subr.mxu0 %v450
    %631 = vmatpush1.msra.mxu0 %v449
    %632 = vmatprep.subr.mxu0 %v454
    %633 = vmatpush1.msra.mxu0 %v453
    %634 = vmatprep.subr.mxu0 %v458
    %635 = vmatpush1.msra.mxu0 %v457
    %636 = vmatprep.subr.mxu0 %v462
    %637 = vmatpush1.msra.mxu0 %v461
    %638 = vmatprep.subr.mxu0 %v466
    %639 = vmatpush1.msra.mxu0 %v465
    %640 = vmatprep.subr.mxu0 %v470
    %641 = vmatpush1.msra.mxu0 %v469
    %642 = vmatprep.subr.mxu0 %v474
    %643 = vmatpush1.msra.mxu0 %v473
    %644 = vmatprep.subr.mxu0 %v478
    %645 = vmatpush1.msra.mxu0 %v477
    %646 = vmatprep.subr.mxu0 %v482
    %647 = vmatpush1.msra.mxu0 %v481
    %648 = vmatprep.subr.mxu0 %v486
    %649 = vmatpush1.msra.mxu0 %v485
    %650 = vmatprep.mubr.f32.mxu0 %v356
    %651 = vmatmul.mubr.f32.gmra.mrb[0].mxu0 %v355
    %v652 = vpop.f32.mrb[0].mxu0
    %v653 = vadd.f32 %v500, %v652
    %v654 = vpop.f32.mrb[0].mxu0
    %v655 = vadd.f32 %v504, %v654
    %656 = vmatprep.mubr.f32.mxu0 %v358
    %657 = vmatmul.mubr.f32.gmra.mrb[0].mxu0 %v357
    %v658 = vpop.f32.mrb[0].mxu0
    %v659 = vadd.f32 %v500, %v658
    %v660 = vpop.f32.mrb[0].mxu0
    %v661 = vadd.f32 %v504, %v660
    %662 = vdwg.mxu0
    %v663 = vld [vmem:[%s12] sm:$0x3]
    %v664 = vld [vmem:[%s13] sm:$0x3]
    %v665 = vld [vmem:[#allocation6] sm:$0xff]
    %v666 = vld [vmem:[#allocation6 + $0x8] sm:$0xff]
    %v667 = vld [vmem:[#allocation6 + $0x10] sm:$0xff]
    %v668 = vld [vmem:[#allocation6 + $0x18] sm:$0xff]
    %v669 = vld [vmem:[#allocation6 + $0x20] sm:$0xff]
    %v670 = vld [vmem:[#allocation6 + $0x28] sm:$0xff]
    %v671 = vld [vmem:[#allocation6 + $0x30] sm:$0xff]
    %v672 = vld [vmem:[#allocation6 + $0x38] sm:$0xff]
    %v673 = vld [vmem:[#allocation6 + $0x40] sm:$0xff]
    %v674 = vld [vmem:[#allocation6 + $0x48] sm:$0xff]
    %v675 = vld [vmem:[#allocation6 + $0x50] sm:$0xff]
    %v676 = vld [vmem:[#allocation6 + $0x58] sm:$0xff]
    %v677 = vld [vmem:[#allocation6 + $0x60] sm:$0xff]
    %v678 = vld [vmem:[#allocation6 + $0x68] sm:$0xff]
    %v679 = vld [vmem:[#allocation6 + $0x70] sm:$0xff]
    %v680 = vld [vmem:[#allocation6 + $0x78] sm:$0xff]
    %v681 = vld [vmem:[#allocation6 + $0x80] sm:$0xff]
    %v682 = vld [vmem:[#allocation6 + $0x88] sm:$0xff]
    %v683 = vld [vmem:[#allocation6 + $0x90] sm:$0xff]
    %v684 = vld [vmem:[#allocation6 + $0x98] sm:$0xff]
    %v685 = vld [vmem:[#allocation6 + $0xa0] sm:$0xff]
    %v686 = vld [vmem:[#allocation6 + $0xa8] sm:$0xff]
    %v687 = vld [vmem:[#allocation6 + $0xb0] sm:$0xff]
    %v688 = vld [vmem:[#allocation6 + $0xb8] sm:$0xff]
    %v689 = vld [vmem:[#allocation6 + $0xc0] sm:$0xff]
    %v690 = vld [vmem:[#allocation6 + $0xc8] sm:$0xff]
    %v691 = vld [vmem:[#allocation6 + $0xd0] sm:$0xff]
    %v692 = vld [vmem:[#allocation6 + $0xd8] sm:$0xff]
    %v693 = vld [vmem:[#allocation6 + $0xe0] sm:$0xff]
    %v694 = vld [vmem:[#allocation6 + $0xe8] sm:$0xff]
    %v695 = vld [vmem:[#allocation6 + $0xf0] sm:$0xff]
    %v696 = vld [vmem:[#allocation6 + $0xf8] sm:$0xff]
    %v697 = vld [vmem:[#allocation6 + $0x100] sm:$0xff]
    %v698 = vld [vmem:[#allocation6 + $0x108] sm:$0xff]
    %v699 = vld [vmem:[#allocation6 + $0x110] sm:$0xff]
    %v700 = vld [vmem:[#allocation6 + $0x118] sm:$0xff]
    %v701 = vld [vmem:[#allocation6 + $0x120] sm:$0xff]
    %v702 = vld [vmem:[#allocation6 + $0x128] sm:$0xff]
    %v703 = vld [vmem:[#allocation6 + $0x130] sm:$0xff]
    %v704 = vld [vmem:[#allocation6 + $0x138] sm:$0xff]
    %v705 = vld [vmem:[#allocation6 + $0x140] sm:$0xff]
    %v706 = vld [vmem:[#allocation6 + $0x148] sm:$0xff]
    %v707 = vld [vmem:[#allocation6 + $0x150] sm:$0xff]
    %v708 = vld [vmem:[#allocation6 + $0x158] sm:$0xff]
    %v709 = vld [vmem:[#allocation6 + $0x160] sm:$0xff]
    %v710 = vld [vmem:[#allocation6 + $0x168] sm:$0xff]
    %v711 = vld [vmem:[#allocation6 + $0x170] sm:$0xff]
    %v712 = vld [vmem:[#allocation6 + $0x178] sm:$0xff]
    %v713 = vld [vmem:[#allocation6 + $0x180] sm:$0xff]
    %v714 = vld [vmem:[#allocation6 + $0x188] sm:$0xff]
    %v715 = vld [vmem:[#allocation6 + $0x190] sm:$0xff]
    %v716 = vld [vmem:[#allocation6 + $0x198] sm:$0xff]
    %v717 = vld [vmem:[#allocation6 + $0x1a0] sm:$0xff]
    %v718 = vld [vmem:[#allocation6 + $0x1a8] sm:$0xff]
    %v719 = vld [vmem:[#allocation6 + $0x1b0] sm:$0xff]
    %v720 = vld [vmem:[#allocation6 + $0x1b8] sm:$0xff]
    %v721 = vld [vmem:[#allocation6 + $0x1c0] sm:$0xff]
    %v722 = vld [vmem:[#allocation6 + $0x1c8] sm:$0xff]
    %v723 = vld [vmem:[#allocation6 + $0x1d0] sm:$0xff]
    %v724 = vld [vmem:[#allocation6 + $0x1d8] sm:$0xff]
    %v725 = vld [vmem:[#allocation6 + $0x1e0] sm:$0xff]
    %v726 = vld [vmem:[#allocation6 + $0x1e8] sm:$0xff]
    %v727 = vld [vmem:[#allocation6 + $0x1f0] sm:$0xff]
    %v728 = vld [vmem:[#allocation6 + $0x1f8] sm:$0xff]
    %729 = vmatprep.subr.mxu0 %v666
    %730 = vmatpush1.msra.mxu0 %v665
    %731 = vmatprep.subr.mxu0 %v670
    %732 = vmatpush1.msra.mxu0 %v669
    %733 = vmatprep.subr.mxu0 %v674
    %734 = vmatpush1.msra.mxu0 %v673
    %735 = vmatprep.subr.mxu0 %v678
    %736 = vmatpush1.msra.mxu0 %v677
    %737 = vmatprep.subr.mxu0 %v682
    %738 = vmatpush1.msra.mxu0 %v681
    %739 = vmatprep.subr.mxu0 %v686
    %740 = vmatpush1.msra.mxu0 %v685
    %741 = vmatprep.subr.mxu0 %v690
    %742 = vmatpush1.msra.mxu0 %v689
    %743 = vmatprep.subr.mxu0 %v694
    %744 = vmatpush1.msra.mxu0 %v693
    %745 = vmatprep.subr.mxu0 %v698
    %746 = vmatpush1.msra.mxu0 %v697
    %747 = vmatprep.subr.mxu0 %v702
    %748 = vmatpush1.msra.mxu0 %v701
    %749 = vmatprep.subr.mxu0 %v706
    %750 = vmatpush1.msra.mxu0 %v705
    %751 = vmatprep.subr.mxu0 %v710
    %752 = vmatpush1.msra.mxu0 %v709
    %753 = vmatprep.subr.mxu0 %v714
    %754 = vmatpush1.msra.mxu0 %v713
    %755 = vmatprep.subr.mxu0 %v718
    %756 = vmatpush1.msra.mxu0 %v717
    %757 = vmatprep.subr.mxu0 %v722
    %758 = vmatpush1.msra.mxu0 %v721
    %759 = vmatprep.subr.mxu0 %v726
    %760 = vmatpush1.msra.mxu0 %v725
    %761 = vmatprep.subr.mxu0 0.0
    %762 = vmatpush1.msra.mxu0 0.0
    %763 = vmatprep.subr.mxu0 0.0
    %764 = vmatpush1.msra.mxu0 0.0
    %765 = vmatprep.subr.mxu0 0.0
    %766 = vmatpush1.msra.mxu0 0.0
    %767 = vmatprep.subr.mxu0 0.0
    %768 = vmatpush1.msra.mxu0 0.0
    %769 = vmatprep.subr.mxu0 0.0
    %770 = vmatpush1.msra.mxu0 0.0
    %771 = vmatprep.subr.mxu0 0.0
    %772 = vmatpush1.msra.mxu0 0.0
    %773 = vmatprep.subr.mxu0 0.0
    %774 = vmatpush1.msra.mxu0 0.0
    %775 = vmatprep.subr.mxu0 0.0
    %776 = vmatpush1.msra.mxu0 0.0
    %777 = vmatprep.subr.mxu0 0.0
    %778 = vmatpush1.msra.mxu0 0.0
    %779 = vmatprep.subr.mxu0 0.0
    %780 = vmatpush1.msra.mxu0 0.0
    %781 = vmatprep.subr.mxu0 0.0
    %782 = vmatpush1.msra.mxu0 0.0
    %783 = vmatprep.subr.mxu0 0.0
    %784 = vmatpush1.msra.mxu0 0.0
    %785 = vmatprep.subr.mxu0 0.0
    %786 = vmatpush1.msra.mxu0 0.0
    %787 = vmatprep.subr.mxu0 0.0
    %788 = vmatpush1.msra.mxu0 0.0
    %789 = vmatprep.subr.mxu0 0.0
    %790 = vmatpush1.msra.mxu0 0.0
    %791 = vmatprep.subr.mxu0 0.0
    %792 = vmatpush1.msra.mxu0 0.0
    %793 = vmatprep.mubr.f32.mxu0 0.0
    %794 = vmatmul.mubr.f32.gmra.mrb[0].mxu0 %v663
    %v795 = vpop.f32.mrb[0].mxu0
    %v796 = vadd.f32 0.0, %v795
    %v797 = vpop.f32.mrb[0].mxu0
    %v798 = vadd.f32 0.0, %v797
    %799 = vdwg.mxu0
    %800 = vmatprep.subr.mxu0 %v668
    %801 = vmatpush1.msra.mxu0 %v667
    %802 = vmatprep.subr.mxu0 %v672
    %803 = vmatpush1.msra.mxu0 %v671
    %804 = vmatprep.subr.mxu0 %v676
    %805 = vmatpush1.msra.mxu0 %v675
    %806 = vmatprep.subr.mxu0 %v680
    %807 = vmatpush1.msra.mxu0 %v679
    %808 = vmatprep.subr.mxu0 %v684
    %809 = vmatpush1.msra.mxu0 %v683
    %810 = vmatprep.subr.mxu0 %v688
    %811 = vmatpush1.msra.mxu0 %v687
    %812 = vmatprep.subr.mxu0 %v692
    %813 = vmatpush1.msra.mxu0 %v691
    %814 = vmatprep.subr.mxu0 %v696
    %815 = vmatpush1.msra.mxu0 %v695
    %816 = vmatprep.subr.mxu0 %v700
    %817 = vmatpush1.msra.mxu0 %v699
    %818 = vmatprep.subr.mxu0 %v704
    %819 = vmatpush1.msra.mxu0 %v703
    %820 = vmatprep.subr.mxu0 %v708
    %821 = vmatpush1.msra.mxu0 %v707
    %822 = vmatprep.subr.mxu0 %v712
    %823 = vmatpush1.msra.mxu0 %v711
    %824 = vmatprep.subr.mxu0 %v716
    %825 = vmatpush1.msra.mxu0 %v715
    %826 = vmatprep.subr.mxu0 %v720
    %827 = vmatpush1.msra.mxu0 %v719
    %828 = vmatprep.subr.mxu0 %v724
    %829 = vmatpush1.msra.mxu0 %v723
    %830 = vmatprep.subr.mxu0 %v728
    %831 = vmatpush1.msra.mxu0 %v727
    %832 = vmatprep.subr.mxu0 0.0
    %833 = vmatpush1.msra.mxu0 0.0
    %834 = vmatprep.subr.mxu0 0.0
    %835 = vmatpush1.msra.mxu0 0.0
    %836 = vmatprep.subr.mxu0 0.0
    %837 = vmatpush1.msra.mxu0 0.0
    %838 = vmatprep.subr.mxu0 0.0
    %839 = vmatpush1.msra.mxu0 0.0
    %840 = vmatprep.subr.mxu0 0.0
    %841 = vmatpush1.msra.mxu0 0.0
    %842 = vmatprep.subr.mxu0 0.0
    %843 = vmatpush1.msra.mxu0 0.0
    %844 = vmatprep.subr.mxu0 0.0
    %845 = vmatpush1.msra.mxu0 0.0
    %846 = vmatprep.subr.mxu0 0.0
    %847 = vmatpush1.msra.mxu0 0.0
    %848 = vmatprep.subr.mxu0 0.0
    %849 = vmatpush1.msra.mxu0 0.0
    %850 = vmatprep.subr.mxu0 0.0
    %851 = vmatpush1.msra.mxu0 0.0
    %852 = vmatprep.subr.mxu0 0.0
    %853 = vmatpush1.msra.mxu0 0.0
    %854 = vmatprep.subr.mxu0 0.0
    %855 = vmatpush1.msra.mxu0 0.0
    %856 = vmatprep.subr.mxu0 0.0
    %857 = vmatpush1.msra.mxu0 0.0
    %858 = vmatprep.subr.mxu0 0.0
    %859 = vmatpush1.msra.mxu0 0.0
    %860 = vmatprep.subr.mxu0 0.0
    %861 = vmatpush1.msra.mxu0 0.0
    %862 = vmatprep.subr.mxu0 0.0
    %863 = vmatpush1.msra.mxu0 0.0
    %864 = vmatprep.mubr.f32.mxu0 0.0
    %865 = vmatmul.mubr.f32.gmra.mrb[0].mxu0 %v663
    %v866 = vpop.f32.mrb[0].mxu0
    %v867 = vadd.f32 0.0, %v866
    %v868 = vpop.f32.mrb[0].mxu0
    %v869 = vadd.f32 0.0, %v868
    %870 = vdwg.mxu0
    %v871 = vadd.f32 %v576, %v796
    %v872 = vadd.f32 %v578, %v798
    %v873 = vadd.f32 %v653, %v867
    %v874 = vadd.f32 %v655, %v869
    %v875 = vxor.u32 %v871, 2147483648
    %v876 = vmul.f32 %v875, 1.442695
    %v877 = vpow.pop %v876
    %v878 = vadd.f32 %v877, 1.0
    %v879 = vrcp.pop %v878
    %v880 = vmul.f32 1.0, %v879
    %v881 = vxor.u32 %v872, 2147483648
    %v882 = vmul.f32 %v881, 1.442695
    %v883 = vpow.pop %v882
    %v884 = vadd.f32 %v883, 1.0
    %v885 = vrcp.pop %v884
    %v886 = vmul.f32 1.0, %v885
    %v887 = vtanh.pop %v873
    %v888 = vxor.u32 %v874, 2147483648
    %v889 = vmul.f32 %v888, 1.442695
    %v890 = vpow.pop %v889
    %v891 = vadd.f32 %v890, 1.0
    %v892 = vrcp.pop %v891
    %v893 = vmul.f32 1.0, %v892
    %v894 = vmul.f32 %v886, %v664
    %v895 = vmul.f32 %v880, %v887
    %v896 = vadd.f32 %v894, %v895
    %v897 = vtanh.pop %v896
    %v898 = vmul.f32 %v893, %v897
    %899 = vmatprep.subr.mxu0 %v666
    %900 = vmatpush1.msra.mxu0 %v665
    %901 = vmatprep.subr.mxu0 %v670
    %902 = vmatpush1.msra.mxu0 %v669
    %903 = vmatprep.subr.mxu0 %v674
    %904 = vmatpush1.msra.mxu0 %v673
    %905 = vmatprep.subr.mxu0 %v678
    %906 = vmatpush1.msra.mxu0 %v677
    %907 = vmatprep.subr.mxu0 %v682
    %908 = vmatpush1.msra.mxu0 %v681
    %909 = vmatprep.subr.mxu0 %v686
    %910 = vmatpush1.msra.mxu0 %v685
    %911 = vmatprep.subr.mxu0 %v690
    %912 = vmatpush1.msra.mxu0 %v689
    %913 = vmatprep.subr.mxu0 %v694
    %914 = vmatpush1.msra.mxu0 %v693
    %915 = vmatprep.subr.mxu0 %v698
    %916 = vmatpush1.msra.mxu0 %v697
    %917 = vmatprep.subr.mxu0 %v702
    %918 = vmatpush1.msra.mxu0 %v701
    %919 = vmatprep.subr.mxu0 %v706
    %920 = vmatpush1.msra.mxu0 %v705
    %921 = vmatprep.subr.mxu0 %v710
    %922 = vmatpush1.msra.mxu0 %v709
    %923 = vmatprep.subr.mxu0 %v714
    %924 = vmatpush1.msra.mxu0 %v713
    %925 = vmatprep.subr.mxu0 %v718
    %926 = vmatpush1.msra.mxu0 %v717
    %927 = vmatprep.subr.mxu0 %v722
    %928 = vmatpush1.msra.mxu0 %v721
    %929 = vmatprep.subr.mxu0 %v726
    %930 = vmatpush1.msra.mxu0 %v725
    %931 = vmatprep.subr.mxu0 0.0
    %932 = vmatpush1.msra.mxu0 0.0
    %933 = vmatprep.subr.mxu0 0.0
    %934 = vmatpush1.msra.mxu0 0.0
    %935 = vmatprep.subr.mxu0 0.0
    %936 = vmatpush1.msra.mxu0 0.0
    %937 = vmatprep.subr.mxu0 0.0
    %938 = vmatpush1.msra.mxu0 0.0
    %939 = vmatprep.subr.mxu0 0.0
    %940 = vmatpush1.msra.mxu0 0.0
    %941 = vmatprep.subr.mxu0 0.0
    %942 = vmatpush1.msra.mxu0 0.0
    %943 = vmatprep.subr.mxu0 0.0
    %944 = vmatpush1.msra.mxu0 0.0
    %945 = vmatprep.subr.mxu0 0.0
    %946 = vmatpush1.msra.mxu0 0.0
    %947 = vmatprep.subr.mxu0 0.0
    %948 = vmatpush1.msra.mxu0 0.0
    %949 = vmatprep.subr.mxu0 0.0
    %950 = vmatpush1.msra.mxu0 0.0
    %951 = vmatprep.subr.mxu0 0.0
    %952 = vmatpush1.msra.mxu0 0.0
    %953 = vmatprep.subr.mxu0 0.0
    %954 = vmatpush1.msra.mxu0 0.0
    %955 = vmatprep.subr.mxu0 0.0
    %956 = vmatpush1.msra.mxu0 0.0
    %957 = vmatprep.subr.mxu0 0.0
    %958 = vmatpush1.msra.mxu0 0.0
    %959 = vmatprep.subr.mxu0 0.0
    %960 = vmatpush1.msra.mxu0 0.0
    %961 = vmatprep.subr.mxu0 0.0
    %962 = vmatpush1.msra.mxu0 0.0
    %963 = vmatprep.mubr.f32.mxu0 0.0
    %964 = vmatmul.mubr.f32.gmra.mrb[0].mxu0 %v898
    %v965 = vpop.f32.mrb[0].mxu0
    %v966 = vadd.f32 0.0, %v965
    %v967 = vpop.f32.mrb[0].mxu0
    %v968 = vadd.f32 0.0, %v967
    %969 = vdwg.mxu0
    %970 = vmatprep.subr.mxu0 %v668
    %971 = vmatpush1.msra.mxu0 %v667
    %972 = vmatprep.subr.mxu0 %v672
    %973 = vmatpush1.msra.mxu0 %v671
    %974 = vmatprep.subr.mxu0 %v676
    %975 = vmatpush1.msra.mxu0 %v675
    %976 = vmatprep.subr.mxu0 %v680
    %977 = vmatpush1.msra.mxu0 %v679
    %978 = vmatprep.subr.mxu0 %v684
    %979 = vmatpush1.msra.mxu0 %v683
    %980 = vmatprep.subr.mxu0 %v688
    %981 = vmatpush1.msra.mxu0 %v687
    %982 = vmatprep.subr.mxu0 %v692
    %983 = vmatpush1.msra.mxu0 %v691
    %984 = vmatprep.subr.mxu0 %v696
    %985 = vmatpush1.msra.mxu0 %v695
    %986 = vmatprep.subr.mxu0 %v700
    %987 = vmatpush1.msra.mxu0 %v699
    %988 = vmatprep.subr.mxu0 %v704
    %989 = vmatpush1.msra.mxu0 %v703
    %990 = vmatprep.subr.mxu0 %v708
    %991 = vmatpush1.msra.mxu0 %v707
    %992 = vmatprep.subr.mxu0 %v712
    %993 = vmatpush1.msra.mxu0 %v711
    %994 = vmatprep.subr.mxu0 %v716
    %995 = vmatpush1.msra.mxu0 %v715
    %996 = vmatprep.subr.mxu0 %v720
    %997 = vmatpush1.msra.mxu0 %v719
    %998 = vmatprep.subr.mxu0 %v724
    %999 = vmatpush1.msra.mxu0 %v723
    %1000 = vmatprep.subr.mxu0 %v728
    %1001 = vmatpush1.msra.mxu0 %v727
    %1002 = vmatprep.subr.mxu0 0.0
    %1003 = vmatpush1.msra.mxu0 0.0
    %1004 = vmatprep.subr.mxu0 0.0
    %1005 = vmatpush1.msra.mxu0 0.0
    %1006 = vmatprep.subr.mxu0 0.0
    %1007 = vmatpush1.msra.mxu0 0.0
    %1008 = vmatprep.subr.mxu0 0.0
    %1009 = vmatpush1.msra.mxu0 0.0
    %1010 = vmatprep.subr.mxu0 0.0
    %1011 = vmatpush1.msra.mxu0 0.0
    %1012 = vmatprep.subr.mxu0 0.0
    %1013 = vmatpush1.msra.mxu0 0.0
    %1014 = vmatprep.subr.mxu0 0.0
    %1015 = vmatpush1.msra.mxu0 0.0
    %1016 = vmatprep.subr.mxu0 0.0
    %1017 = vmatpush1.msra.mxu0 0.0
    %1018 = vmatprep.subr.mxu0 0.0
    %1019 = vmatpush1.msra.mxu0 0.0
    %1020 = vmatprep.subr.mxu0 0.0
    %1021 = vmatpush1.msra.mxu0 0.0
    %1022 = vmatprep.subr.mxu0 0.0
    %1023 = vmatpush1.msra.mxu0 0.0
    %1024 = vmatprep.subr.mxu0 0.0
    %1025 = vmatpush1.msra.mxu0 0.0
    %1026 = vmatprep.subr.mxu0 0.0
    %1027 = vmatpush1.msra.mxu0 0.0
    %1028 = vmatprep.subr.mxu0 0.0
    %1029 = vmatpush1.msra.mxu0 0.0
    %1030 = vmatprep.subr.mxu0 0.0
    %1031 = vmatpush1.msra.mxu0 0.0
    %1032 = vmatprep.subr.mxu0 0.0
    %1033 = vmatpush1.msra.mxu0 0.0
    %1034 = vmatprep.mubr.f32.mxu0 0.0
    %1035 = vmatmul.mubr.f32.gmra.mrb[0].mxu0 %v898
    %v1036 = vpop.f32.mrb[0].mxu0
    %v1037 = vadd.f32 0.0, %v1036
    %v1038 = vpop.f32.mrb[0].mxu0
    %v1039 = vadd.f32 0.0, %v1038
    %1040 = vdwg.mxu0
    %v1045 = vrot.slane %v966, 6
    %v1046 = vrot.slane %v968, 6
    %v1047 = vrot.slane %v1037, 6
    %v1048 = vrot.slane %v1039, 6
    %v1053 = vadd.f32 %v576, %v1045
    %v1054 = vadd.f32 %v578, %v1046
    %v1055 = vadd.f32 %v653, %v1047
    %v1056 = vadd.f32 %v655, %v1048
    %v1057 = vxor.u32 %v1053, 2147483648
    %v1058 = vmul.f32 %v1057, 1.442695
    %v1059 = vpow.pop %v1058
    %v1060 = vadd.f32 %v1059, 1.0
    %v1061 = vrcp.pop %v1060
    %v1062 = vmul.f32 1.0, %v1061
    %v1063 = vxor.u32 %v1054, 2147483648
    %v1064 = vmul.f32 %v1063, 1.442695
    %v1065 = vpow.pop %v1064
    %v1066 = vadd.f32 %v1065, 1.0
    %v1067 = vrcp.pop %v1066
    %v1068 = vmul.f32 1.0, %v1067
    %v1069 = vtanh.pop %v1055
    %v1070 = vxor.u32 %v1056, 2147483648
    %v1071 = vmul.f32 %v1070, 1.442695
    %v1072 = vpow.pop %v1071
    %v1073 = vadd.f32 %v1072, 1.0
    %v1074 = vrcp.pop %v1073
    %v1075 = vmul.f32 1.0, %v1074
    %v1077 = vrot.slane %v896, 6
    %v1079 = vmul.f32 %v1068, %v1077
    %v1080 = vmul.f32 %v1062, %v1069
    %v1081 = vadd.f32 %v1079, %v1080
    %v1082 = vtanh.pop %v1081
    %v1083 = vmul.f32 %v1075, %v1082
    %v1085 = vrot.slane %v1083, 2
    %1087 = vmatprep.subr.mxu0 %v666
    %1088 = vmatpush1.msra.mxu0 %v665
    %1089 = vmatprep.subr.mxu0 %v670
    %1090 = vmatpush1.msra.mxu0 %v669
    %1091 = vmatprep.subr.mxu0 %v674
    %1092 = vmatpush1.msra.mxu0 %v673
    %1093 = vmatprep.subr.mxu0 %v678
    %1094 = vmatpush1.msra.mxu0 %v677
    %1095 = vmatprep.subr.mxu0 %v682
    %1096 = vmatpush1.msra.mxu0 %v681
    %1097 = vmatprep.subr.mxu0 %v686
    %1098 = vmatpush1.msra.mxu0 %v685
    %1099 = vmatprep.subr.mxu0 %v690
    %1100 = vmatpush1.msra.mxu0 %v689
    %1101 = vmatprep.subr.mxu0 %v694
    %1102 = vmatpush1.msra.mxu0 %v693
    %1103 = vmatprep.subr.mxu0 %v698
    %1104 = vmatpush1.msra.mxu0 %v697
    %1105 = vmatprep.subr.mxu0 %v702
    %1106 = vmatpush1.msra.mxu0 %v701
    %1107 = vmatprep.subr.mxu0 %v706
    %1108 = vmatpush1.msra.mxu0 %v705
    %1109 = vmatprep.subr.mxu0 %v710
    %1110 = vmatpush1.msra.mxu0 %v709
    %1111 = vmatprep.subr.mxu0 %v714
    %1112 = vmatpush1.msra.mxu0 %v713
    %1113 = vmatprep.subr.mxu0 %v718
    %1114 = vmatpush1.msra.mxu0 %v717
    %1115 = vmatprep.subr.mxu0 %v722
    %1116 = vmatpush1.msra.mxu0 %v721
    %1117 = vmatprep.subr.mxu0 %v726
    %1118 = vmatpush1.msra.mxu0 %v725
    %1119 = vmatprep.subr.mxu0 0.0
    %1120 = vmatpush1.msra.mxu0 0.0
    %1121 = vmatprep.subr.mxu0 0.0
    %1122 = vmatpush1.msra.mxu0 0.0
    %1123 = vmatprep.subr.mxu0 0.0
    %1124 = vmatpush1.msra.mxu0 0.0
    %1125 = vmatprep.subr.mxu0 0.0
    %1126 = vmatpush1.msra.mxu0 0.0
    %1127 = vmatprep.subr.mxu0 0.0
    %1128 = vmatpush1.msra.mxu0 0.0
    %1129 = vmatprep.subr.mxu0 0.0
    %1130 = vmatpush1.msra.mxu0 0.0
    %1131 = vmatprep.subr.mxu0 0.0
    %1132 = vmatpush1.msra.mxu0 0.0
    %1133 = vmatprep.subr.mxu0 0.0
    %1134 = vmatpush1.msra.mxu0 0.0
    %1135 = vmatprep.subr.mxu0 0.0
    %1136 = vmatpush1.msra.mxu0 0.0
    %1137 = vmatprep.subr.mxu0 0.0
    %1138 = vmatpush1.msra.mxu0 0.0
    %1139 = vmatprep.subr.mxu0 0.0
    %1140 = vmatpush1.msra.mxu0 0.0
    %1141 = vmatprep.subr.mxu0 0.0
    %1142 = vmatpush1.msra.mxu0 0.0
    %1143 = vmatprep.subr.mxu0 0.0
    %1144 = vmatpush1.msra.mxu0 0.0
    %1145 = vmatprep.subr.mxu0 0.0
    %1146 = vmatpush1.msra.mxu0 0.0
    %1147 = vmatprep.subr.mxu0 0.0
    %1148 = vmatpush1.msra.mxu0 0.0
    %1149 = vmatprep.subr.mxu0 0.0
    %1150 = vmatpush1.msra.mxu0 0.0
    %1151 = vmatprep.mubr.f32.mxu0 0.0
    %1152 = vmatmul.mubr.f32.gmra.mrb[0].mxu0 %v1085
    %v1153 = vpop.f32.mrb[0].mxu0
    %v1154 = vadd.f32 0.0, %v1153
    %v1155 = vpop.f32.mrb[0].mxu0
    %v1156 = vadd.f32 0.0, %v1155
    %1157 = vdwg.mxu0
    %1158 = vmatprep.subr.mxu0 %v668
    %1159 = vmatpush1.msra.mxu0 %v667
    %1160 = vmatprep.subr.mxu0 %v672
    %1161 = vmatpush1.msra.mxu0 %v671
    %1162 = vmatprep.subr.mxu0 %v676
    %1163 = vmatpush1.msra.mxu0 %v675
    %1164 = vmatprep.subr.mxu0 %v680
    %1165 = vmatpush1.msra.mxu0 %v679
    %1166 = vmatprep.subr.mxu0 %v684
    %1167 = vmatpush1.msra.mxu0 %v683
    %1168 = vmatprep.subr.mxu0 %v688
    %1169 = vmatpush1.msra.mxu0 %v687
    %1170 = vmatprep.subr.mxu0 %v692
    %1171 = vmatpush1.msra.mxu0 %v691
    %1172 = vmatprep.subr.mxu0 %v696
    %1173 = vmatpush1.msra.mxu0 %v695
    %1174 = vmatprep.subr.mxu0 %v700
    %1175 = vmatpush1.msra.mxu0 %v699
    %1176 = vmatprep.subr.mxu0 %v704
    %1177 = vmatpush1.msra.mxu0 %v703
    %1178 = vmatprep.subr.mxu0 %v708
    %1179 = vmatpush1.msra.mxu0 %v707
    %1180 = vmatprep.subr.mxu0 %v712
    %1181 = vmatpush1.msra.mxu0 %v711
    %1182 = vmatprep.subr.mxu0 %v716
    %1183 = vmatpush1.msra.mxu0 %v715
    %1184 = vmatprep.subr.mxu0 %v720
    %1185 = vmatpush1.msra.mxu0 %v719
    %1186 = vmatprep.subr.mxu0 %v724
    %1187 = vmatpush1.msra.mxu0 %v723
    %1188 = vmatprep.subr.mxu0 %v728
    %1189 = vmatpush1.msra.mxu0 %v727
    %1190 = vmatprep.subr.mxu0 0.0
    %1191 = vmatpush1.msra.mxu0 0.0
    %1192 = vmatprep.subr.mxu0 0.0
    %1193 = vmatpush1.msra.mxu0 0.0
    %1194 = vmatprep.subr.mxu0 0.0
    %1195 = vmatpush1.msra.mxu0 0.0
    %1196 = vmatprep.subr.mxu0 0.0
    %1197 = vmatpush1.msra.mxu0 0.0
    %1198 = vmatprep.subr.mxu0 0.0
    %1199 = vmatpush1.msra.mxu0 0.0
    %1200 = vmatprep.subr.mxu0 0.0
    %1201 = vmatpush1.msra.mxu0 0.0
    %1202 = vmatprep.subr.mxu0 0.0
    %1203 = vmatpush1.msra.mxu0 0.0
    %1204 = vmatprep.subr.mxu0 0.0
    %1205 = vmatpush1.msra.mxu0 0.0
    %1206 = vmatprep.subr.mxu0 0.0
    %1207 = vmatpush1.msra.mxu0 0.0
    %1208 = vmatprep.subr.mxu0 0.0
    %1209 = vmatpush1.msra.mxu0 0.0
    %1210 = vmatprep.subr.mxu0 0.0
    %1211 = vmatpush1.msra.mxu0 0.0
    %1212 = vmatprep.subr.mxu0 0.0
    %1213 = vmatpush1.msra.mxu0 0.0
    %1214 = vmatprep.subr.mxu0 0.0
    %1215 = vmatpush1.msra.mxu0 0.0
    %1216 = vmatprep.subr.mxu0 0.0
    %1217 = vmatpush1.msra.mxu0 0.0
    %1218 = vmatprep.subr.mxu0 0.0
    %1219 = vmatpush1.msra.mxu0 0.0
    %1220 = vmatprep.subr.mxu0 0.0
    %1221 = vmatpush1.msra.mxu0 0.0
    %1222 = vmatprep.mubr.f32.mxu0 0.0
    %1223 = vmatmul.mubr.f32.gmra.mrb[0].mxu0 %v1085
    %v1224 = vpop.f32.mrb[0].mxu0
    %v1225 = vadd.f32 0.0, %v1224
    %v1226 = vpop.f32.mrb[0].mxu0
    %v1227 = vadd.f32 0.0, %v1226
    %1228 = vdwg.mxu0
    %v1233 = vrot.slane %v1154, 4
    %v1234 = vrot.slane %v1156, 4
    %v1235 = vrot.slane %v1225, 4
    %v1236 = vrot.slane %v1227, 4
    %v1241 = vadd.f32 %v576, %v1233
    %v1242 = vadd.f32 %v578, %v1234
    %v1243 = vadd.f32 %v653, %v1235
    %v1244 = vadd.f32 %v655, %v1236
    %v1245 = vxor.u32 %v1241, 2147483648
    %v1246 = vmul.f32 %v1245, 1.442695
    %v1247 = vpow.pop %v1246
    %v1248 = vadd.f32 %v1247, 1.0
    %v1249 = vrcp.pop %v1248
    %v1250 = vmul.f32 1.0, %v1249
    %v1251 = vxor.u32 %v1242, 2147483648
    %v1252 = vmul.f32 %v1251, 1.442695
    %v1253 = vpow.pop %v1252
    %v1254 = vadd.f32 %v1253, 1.0
    %v1255 = vrcp.pop %v1254
    %v1256 = vmul.f32 1.0, %v1255
    %v1257 = vtanh.pop %v1243
    %v1258 = vxor.u32 %v1244, 2147483648
    %v1259 = vmul.f32 %v1258, 1.442695
    %v1260 = vpow.pop %v1259
    %v1261 = vadd.f32 %v1260, 1.0
    %v1262 = vrcp.pop %v1261
    %v1263 = vmul.f32 1.0, %v1262
    %v1265 = vrot.slane %v1081, 6
    %v1267 = vmul.f32 %v1256, %v1265
    %v1268 = vmul.f32 %v1250, %v1257
    %v1269 = vadd.f32 %v1267, %v1268
    %v1270 = vtanh.pop %v1269
    %v1271 = vmul.f32 %v1263, %v1270
    %v1273 = vrot.slane %v1271, 4
    %1275 = vmatprep.subr.mxu0 %v666
    %1276 = vmatpush1.msra.mxu0 %v665
    %1277 = vmatprep.subr.mxu0 %v670
    %1278 = vmatpush1.msra.mxu0 %v669
    %1279 = vmatprep.subr.mxu0 %v674
    %1280 = vmatpush1.msra.mxu0 %v673
    %1281 = vmatprep.subr.mxu0 %v678
    %1282 = vmatpush1.msra.mxu0 %v677
    %1283 = vmatprep.subr.mxu0 %v682
    %1284 = vmatpush1.msra.mxu0 %v681
    %1285 = vmatprep.subr.mxu0 %v686
    %1286 = vmatpush1.msra.mxu0 %v685
    %1287 = vmatprep.subr.mxu0 %v690
    %1288 = vmatpush1.msra.mxu0 %v689
    %1289 = vmatprep.subr.mxu0 %v694
    %1290 = vmatpush1.msra.mxu0 %v693
    %1291 = vmatprep.subr.mxu0 %v698
    %1292 = vmatpush1.msra.mxu0 %v697
    %1293 = vmatprep.subr.mxu0 %v702
    %1294 = vmatpush1.msra.mxu0 %v701
    %1295 = vmatprep.subr.mxu0 %v706
    %1296 = vmatpush1.msra.mxu0 %v705
    %1297 = vmatprep.subr.mxu0 %v710
    %1298 = vmatpush1.msra.mxu0 %v709
    %1299 = vmatprep.subr.mxu0 %v714
    %1300 = vmatpush1.msra.mxu0 %v713
    %1301 = vmatprep.subr.mxu0 %v718
    %1302 = vmatpush1.msra.mxu0 %v717
    %1303 = vmatprep.subr.mxu0 %v722
    %1304 = vmatpush1.msra.mxu0 %v721
    %1305 = vmatprep.subr.mxu0 %v726
    %1306 = vmatpush1.msra.mxu0 %v725
    %1307 = vmatprep.subr.mxu0 0.0
    %1308 = vmatpush1.msra.mxu0 0.0
    %1309 = vmatprep.subr.mxu0 0.0
    %1310 = vmatpush1.msra.mxu0 0.0
    %1311 = vmatprep.subr.mxu0 0.0
    %1312 = vmatpush1.msra.mxu0 0.0
    %1313 = vmatprep.subr.mxu0 0.0
    %1314 = vmatpush1.msra.mxu0 0.0
    %1315 = vmatprep.subr.mxu0 0.0
    %1316 = vmatpush1.msra.mxu0 0.0
    %1317 = vmatprep.subr.mxu0 0.0
    %1318 = vmatpush1.msra.mxu0 0.0
    %1319 = vmatprep.subr.mxu0 0.0
    %1320 = vmatpush1.msra.mxu0 0.0
    %1321 = vmatprep.subr.mxu0 0.0
    %1322 = vmatpush1.msra.mxu0 0.0
    %1323 = vmatprep.subr.mxu0 0.0
    %1324 = vmatpush1.msra.mxu0 0.0
    %1325 = vmatprep.subr.mxu0 0.0
    %1326 = vmatpush1.msra.mxu0 0.0
    %1327 = vmatprep.subr.mxu0 0.0
    %1328 = vmatpush1.msra.mxu0 0.0
    %1329 = vmatprep.subr.mxu0 0.0
    %1330 = vmatpush1.msra.mxu0 0.0
    %1331 = vmatprep.subr.mxu0 0.0
    %1332 = vmatpush1.msra.mxu0 0.0
    %1333 = vmatprep.subr.mxu0 0.0
    %1334 = vmatpush1.msra.mxu0 0.0
    %1335 = vmatprep.subr.mxu0 0.0
    %1336 = vmatpush1.msra.mxu0 0.0
    %1337 = vmatprep.subr.mxu0 0.0
    %1338 = vmatpush1.msra.mxu0 0.0
    %1339 = vmatprep.mubr.f32.mxu0 0.0
    %1340 = vmatmul.mubr.f32.gmra.mrb[0].mxu0 %v1273
    %v1341 = vpop.f32.mrb[0].mxu0
    %v1342 = vadd.f32 0.0, %v1341
    %v1343 = vpop.f32.mrb[0].mxu0
    %v1344 = vadd.f32 0.0, %v1343
    %1345 = vdwg.mxu0
    %1346 = vmatprep.subr.mxu0 %v668
    %1347 = vmatpush1.msra.mxu0 %v667
    %1348 = vmatprep.subr.mxu0 %v672
    %1349 = vmatpush1.msra.mxu0 %v671
    %1350 = vmatprep.subr.mxu0 %v676
    %1351 = vmatpush1.msra.mxu0 %v675
    %1352 = vmatprep.subr.mxu0 %v680
    %1353 = vmatpush1.msra.mxu0 %v679
    %1354 = vmatprep.subr.mxu0 %v684
    %1355 = vmatpush1.msra.mxu0 %v683
    %1356 = vmatprep.subr.mxu0 %v688
    %1357 = vmatpush1.msra.mxu0 %v687
    %1358 = vmatprep.subr.mxu0 %v692
    %1359 = vmatpush1.msra.mxu0 %v691
    %1360 = vmatprep.subr.mxu0 %v696
    %1361 = vmatpush1.msra.mxu0 %v695
    %1362 = vmatprep.subr.mxu0 %v700
    %1363 = vmatpush1.msra.mxu0 %v699
    %1364 = vmatprep.subr.mxu0 %v704
    %1365 = vmatpush1.msra.mxu0 %v703
    %1366 = vmatprep.subr.mxu0 %v708
    %1367 = vmatpush1.msra.mxu0 %v707
    %1368 = vmatprep.subr.mxu0 %v712
    %1369 = vmatpush1.msra.mxu0 %v711
    %1370 = vmatprep.subr.mxu0 %v716
    %1371 = vmatpush1.msra.mxu0 %v715
    %1372 = vmatprep.subr.mxu0 %v720
    %1373 = vmatpush1.msra.mxu0 %v719
    %1374 = vmatprep.subr.mxu0 %v724
    %1375 = vmatpush1.msra.mxu0 %v723
    %1376 = vmatprep.subr.mxu0 %v728
    %1377 = vmatpush1.msra.mxu0 %v727
    %1378 = vmatprep.subr.mxu0 0.0
    %1379 = vmatpush1.msra.mxu0 0.0
    %1380 = vmatprep.subr.mxu0 0.0
    %1381 = vmatpush1.msra.mxu0 0.0
    %1382 = vmatprep.subr.mxu0 0.0
    %1383 = vmatpush1.msra.mxu0 0.0
    %1384 = vmatprep.subr.mxu0 0.0
    %1385 = vmatpush1.msra.mxu0 0.0
    %1386 = vmatprep.subr.mxu0 0.0
    %1387 = vmatpush1.msra.mxu0 0.0
    %1388 = vmatprep.subr.mxu0 0.0
    %1389 = vmatpush1.msra.mxu0 0.0
    %1390 = vmatprep.subr.mxu0 0.0
    %1391 = vmatpush1.msra.mxu0 0.0
    %1392 = vmatprep.subr.mxu0 0.0
    %1393 = vmatpush1.msra.mxu0 0.0
    %1394 = vmatprep.subr.mxu0 0.0
    %1395 = vmatpush1.msra.mxu0 0.0
    %1396 = vmatprep.subr.mxu0 0.0
    %1397 = vmatpush1.msra.mxu0 0.0
    %1398 = vmatprep.subr.mxu0 0.0
    %1399 = vmatpush1.msra.mxu0 0.0
    %1400 = vmatprep.subr.mxu0 0.0
    %1401 = vmatpush1.msra.mxu0 0.0
    %1402 = vmatprep.subr.mxu0 0.0
    %1403 = vmatpush1.msra.mxu0 0.0
    %1404 = vmatprep.subr.mxu0 0.0
    %1405 = vmatpush1.msra.mxu0 0.0
    %1406 = vmatprep.subr.mxu0 0.0
    %1407 = vmatpush1.msra.mxu0 0.0
    %1408 = vmatprep.subr.mxu0 0.0
    %1409 = vmatpush1.msra.mxu0 0.0
    %1410 = vmatprep.mubr.f32.mxu0 0.0
    %1411 = vmatmul.mubr.f32.gmra.mrb[0].mxu0 %v1273
    %v1412 = vpop.f32.mrb[0].mxu0
    %v1413 = vadd.f32 0.0, %v1412
    %v1414 = vpop.f32.mrb[0].mxu0
    %v1415 = vadd.f32 0.0, %v1414
    %1416 = vdwg.mxu0
    %v1421 = vrot.slane %v1342, 2
    %v1422 = vrot.slane %v1344, 2
    %v1423 = vrot.slane %v1413, 2
    %v1424 = vrot.slane %v1415, 2
    %v1429 = vadd.f32 %v576, %v1421
    %v1430 = vadd.f32 %v578, %v1422
    %v1431 = vadd.f32 %v653, %v1423
    %v1432 = vadd.f32 %v655, %v1424
    %v1433 = vxor.u32 %v1429, 2147483648
    %v1434 = vmul.f32 %v1433, 1.442695
    %v1435 = vpow.pop %v1434
    %v1436 = vadd.f32 %v1435, 1.0
    %v1437 = vrcp.pop %v1436
    %v1438 = vmul.f32 1.0, %v1437
    %v1439 = vxor.u32 %v1430, 2147483648
    %v1440 = vmul.f32 %v1439, 1.442695
    %v1441 = vpow.pop %v1440
    %v1442 = vadd.f32 %v1441, 1.0
    %v1443 = vrcp.pop %v1442
    %v1444 = vmul.f32 1.0, %v1443
    %v1445 = vtanh.pop %v1431
    %v1446 = vxor.u32 %v1432, 2147483648
    %v1447 = vmul.f32 %v1446, 1.442695
    %v1448 = vpow.pop %v1447
    %v1449 = vadd.f32 %v1448, 1.0
    %v1450 = vrcp.pop %v1449
    %v1451 = vmul.f32 1.0, %v1450
    %v1453 = vrot.slane %v1269, 6
    %v1455 = vmul.f32 %v1444, %v1453
    %v1456 = vmul.f32 %v1438, %v1445
    %v1457 = vadd.f32 %v1455, %v1456
    %v1458 = vtanh.pop %v1457
    %v1459 = vmul.f32 %v1451, %v1458
    %v1461 = vrot.slane %v1459, 6
    %1463 = vmatprep.subr.mxu0 %v666
    %1464 = vmatpush1.msra.mxu0 %v665
    %1465 = vmatprep.subr.mxu0 %v670
    %1466 = vmatpush1.msra.mxu0 %v669
    %1467 = vmatprep.subr.mxu0 %v674
    %1468 = vmatpush1.msra.mxu0 %v673
    %1469 = vmatprep.subr.mxu0 %v678
    %1470 = vmatpush1.msra.mxu0 %v677
    %1471 = vmatprep.subr.mxu0 %v682
    %1472 = vmatpush1.msra.mxu0 %v681
    %1473 = vmatprep.subr.mxu0 %v686
    %1474 = vmatpush1.msra.mxu0 %v685
    %1475 = vmatprep.subr.mxu0 %v690
    %1476 = vmatpush1.msra.mxu0 %v689
    %1477 = vmatprep.subr.mxu0 %v694
    %1478 = vmatpush1.msra.mxu0 %v693
    %1479 = vmatprep.subr.mxu0 %v698
    %1480 = vmatpush1.msra.mxu0 %v697
    %1481 = vmatprep.subr.mxu0 %v702
    %1482 = vmatpush1.msra.mxu0 %v701
    %1483 = vmatprep.subr.mxu0 %v706
    %1484 = vmatpush1.msra.mxu0 %v705
    %1485 = vmatprep.subr.mxu0 %v710
    %1486 = vmatpush1.msra.mxu0 %v709
    %1487 = vmatprep.subr.mxu0 %v714
    %1488 = vmatpush1.msra.mxu0 %v713
    %1489 = vmatprep.subr.mxu0 %v718
    %1490 = vmatpush1.msra.mxu0 %v717
    %1491 = vmatprep.subr.mxu0 %v722
    %1492 = vmatpush1.msra.mxu0 %v721
    %1493 = vmatprep.subr.mxu0 %v726
    %1494 = vmatpush1.msra.mxu0 %v725
    %1495 = vmatprep.subr.mxu0 0.0
    %1496 = vmatpush1.msra.mxu0 0.0
    %1497 = vmatprep.subr.mxu0 0.0
    %1498 = vmatpush1.msra.mxu0 0.0
    %1499 = vmatprep.subr.mxu0 0.0
    %1500 = vmatpush1.msra.mxu0 0.0
    %1501 = vmatprep.subr.mxu0 0.0
    %1502 = vmatpush1.msra.mxu0 0.0
    %1503 = vmatprep.subr.mxu0 0.0
    %1504 = vmatpush1.msra.mxu0 0.0
    %1505 = vmatprep.subr.mxu0 0.0
    %1506 = vmatpush1.msra.mxu0 0.0
    %1507 = vmatprep.subr.mxu0 0.0
    %1508 = vmatpush1.msra.mxu0 0.0
    %1509 = vmatprep.subr.mxu0 0.0
    %1510 = vmatpush1.msra.mxu0 0.0
    %1511 = vmatprep.subr.mxu0 0.0
    %1512 = vmatpush1.msra.mxu0 0.0
    %1513 = vmatprep.subr.mxu0 0.0
    %1514 = vmatpush1.msra.mxu0 0.0
    %1515 = vmatprep.subr.mxu0 0.0
    %1516 = vmatpush1.msra.mxu0 0.0
    %1517 = vmatprep.subr.mxu0 0.0
    %1518 = vmatpush1.msra.mxu0 0.0
    %1519 = vmatprep.subr.mxu0 0.0
    %1520 = vmatpush1.msra.mxu0 0.0
    %1521 = vmatprep.subr.mxu0 0.0
    %1522 = vmatpush1.msra.mxu0 0.0
    %1523 = vmatprep.subr.mxu0 0.0
    %1524 = vmatpush1.msra.mxu0 0.0
    %1525 = vmatprep.subr.mxu0 0.0
    %1526 = vmatpush1.msra.mxu0 0.0
    %1527 = vmatprep.mubr.f32.mxu0 0.0
    %1528 = vmatmul.mubr.f32.gmra.mrb[0].mxu0 %v1461
    %v1529 = vpop.f32.mrb[0].mxu0
    %v1530 = vadd.f32 0.0, %v1529
    %v1531 = vpop.f32.mrb[0].mxu0
    %v1532 = vadd.f32 0.0, %v1531
    %1533 = vdwg.mxu0
    %1534 = vmatprep.subr.mxu0 %v668
    %1535 = vmatpush1.msra.mxu0 %v667
    %1536 = vmatprep.subr.mxu0 %v672
    %1537 = vmatpush1.msra.mxu0 %v671
    %1538 = vmatprep.subr.mxu0 %v676
    %1539 = vmatpush1.msra.mxu0 %v675
    %1540 = vmatprep.subr.mxu0 %v680
    %1541 = vmatpush1.msra.mxu0 %v679
    %1542 = vmatprep.subr.mxu0 %v684
    %1543 = vmatpush1.msra.mxu0 %v683
    %1544 = vmatprep.subr.mxu0 %v688
    %1545 = vmatpush1.msra.mxu0 %v687
    %1546 = vmatprep.subr.mxu0 %v692
    %1547 = vmatpush1.msra.mxu0 %v691
    %1548 = vmatprep.subr.mxu0 %v696
    %1549 = vmatpush1.msra.mxu0 %v695
    %1550 = vmatprep.subr.mxu0 %v700
    %1551 = vmatpush1.msra.mxu0 %v699
    %1552 = vmatprep.subr.mxu0 %v704
    %1553 = vmatpush1.msra.mxu0 %v703
    %1554 = vmatprep.subr.mxu0 %v708
    %1555 = vmatpush1.msra.mxu0 %v707
    %1556 = vmatprep.subr.mxu0 %v712
    %1557 = vmatpush1.msra.mxu0 %v711
    %1558 = vmatprep.subr.mxu0 %v716
    %1559 = vmatpush1.msra.mxu0 %v715
    %1560 = vmatprep.subr.mxu0 %v720
    %1561 = vmatpush1.msra.mxu0 %v719
    %1562 = vmatprep.subr.mxu0 %v724
    %1563 = vmatpush1.msra.mxu0 %v723
    %1564 = vmatprep.subr.mxu0 %v728
    %1565 = vmatpush1.msra.mxu0 %v727
    %1566 = vmatprep.subr.mxu0 0.0
    %1567 = vmatpush1.msra.mxu0 0.0
    %1568 = vmatprep.subr.mxu0 0.0
    %1569 = vmatpush1.msra.mxu0 0.0
    %1570 = vmatprep.subr.mxu0 0.0
    %1571 = vmatpush1.msra.mxu0 0.0
    %1572 = vmatprep.subr.mxu0 0.0
    %1573 = vmatpush1.msra.mxu0 0.0
    %1574 = vmatprep.subr.mxu0 0.0
    %1575 = vmatpush1.msra.mxu0 0.0
    %1576 = vmatprep.subr.mxu0 0.0
    %1577 = vmatpush1.msra.mxu0 0.0
    %1578 = vmatprep.subr.mxu0 0.0
    %1579 = vmatpush1.msra.mxu0 0.0
    %1580 = vmatprep.subr.mxu0 0.0
    %1581 = vmatpush1.msra.mxu0 0.0
    %1582 = vmatprep.subr.mxu0 0.0
    %1583 = vmatpush1.msra.mxu0 0.0
    %1584 = vmatprep.subr.mxu0 0.0
    %1585 = vmatpush1.msra.mxu0 0.0
    %1586 = vmatprep.subr.mxu0 0.0
    %1587 = vmatpush1.msra.mxu0 0.0
    %1588 = vmatprep.subr.mxu0 0.0
    %1589 = vmatpush1.msra.mxu0 0.0
    %1590 = vmatprep.subr.mxu0 0.0
    %1591 = vmatpush1.msra.mxu0 0.0
    %1592 = vmatprep.subr.mxu0 0.0
    %1593 = vmatpush1.msra.mxu0 0.0
    %1594 = vmatprep.subr.mxu0 0.0
    %1595 = vmatpush1.msra.mxu0 0.0
    %1596 = vmatprep.subr.mxu0 0.0
    %1597 = vmatpush1.msra.mxu0 0.0
    %1598 = vmatprep.mubr.f32.mxu0 0.0
    %1599 = vmatmul.mubr.f32.gmra.mrb[0].mxu0 %v1461
    %v1600 = vpop.f32.mrb[0].mxu0
    %v1601 = vadd.f32 0.0, %v1600
    %v1602 = vpop.f32.mrb[0].mxu0
    %v1603 = vadd.f32 0.0, %v1602
    %1604 = vdwg.mxu0
    %v1605 = vadd.f32 %v582, %v1530
    %v1606 = vadd.f32 %v584, %v1532
    %v1607 = vadd.f32 %v659, %v1601
    %v1608 = vadd.f32 %v661, %v1603
    %v1609 = vxor.u32 %v1605, 2147483648
    %v1610 = vmul.f32 %v1609, 1.442695
    %v1611 = vpow.pop %v1610
    %v1612 = vadd.f32 %v1611, 1.0
    %v1613 = vrcp.pop %v1612
    %v1614 = vmul.f32 1.0, %v1613
    %v1615 = vxor.u32 %v1606, 2147483648
    %v1616 = vmul.f32 %v1615, 1.442695
    %v1617 = vpow.pop %v1616
    %v1618 = vadd.f32 %v1617, 1.0
    %v1619 = vrcp.pop %v1618
    %v1620 = vmul.f32 1.0, %v1619
    %v1621 = vtanh.pop %v1607
    %v1622 = vxor.u32 %v1608, 2147483648
    %v1623 = vmul.f32 %v1622, 1.442695
    %v1624 = vpow.pop %v1623
    %v1625 = vadd.f32 %v1624, 1.0
    %v1626 = vrcp.pop %v1625
    %v1627 = vmul.f32 1.0, %v1626
    %v1629 = vrot.slane %v1457, 6
    %v1631 = vmul.f32 %v1620, %v1629
    %v1632 = vmul.f32 %v1614, %v1621
    %v1633 = vadd.f32 %v1631, %v1632
    %v1634 = vtanh.pop %v1633
    %v1635 = vmul.f32 %v1627, %v1634
    %1636 = vmatprep.subr.mxu0 %v666
    %1637 = vmatpush1.msra.mxu0 %v665
    %1638 = vmatprep.subr.mxu0 %v670
    %1639 = vmatpush1.msra.mxu0 %v669
    %1640 = vmatprep.subr.mxu0 %v674
    %1641 = vmatpush1.msra.mxu0 %v673
    %1642 = vmatprep.subr.mxu0 %v678
    %1643 = vmatpush1.msra.mxu0 %v677
    %1644 = vmatprep.subr.mxu0 %v682
    %1645 = vmatpush1.msra.mxu0 %v681
    %1646 = vmatprep.subr.mxu0 %v686
    %1647 = vmatpush1.msra.mxu0 %v685
    %1648 = vmatprep.subr.mxu0 %v690
    %1649 = vmatpush1.msra.mxu0 %v689
    %1650 = vmatprep.subr.mxu0 %v694
    %1651 = vmatpush1.msra.mxu0 %v693
    %1652 = vmatprep.subr.mxu0 %v698
    %1653 = vmatpush1.msra.mxu0 %v697
    %1654 = vmatprep.subr.mxu0 %v702
    %1655 = vmatpush1.msra.mxu0 %v701
    %1656 = vmatprep.subr.mxu0 %v706
    %1657 = vmatpush1.msra.mxu0 %v705
    %1658 = vmatprep.subr.mxu0 %v710
    %1659 = vmatpush1.msra.mxu0 %v709
    %1660 = vmatprep.subr.mxu0 %v714
    %1661 = vmatpush1.msra.mxu0 %v713
    %1662 = vmatprep.subr.mxu0 %v718
    %1663 = vmatpush1.msra.mxu0 %v717
    %1664 = vmatprep.subr.mxu0 %v722
    %1665 = vmatpush1.msra.mxu0 %v721
    %1666 = vmatprep.subr.mxu0 %v726
    %1667 = vmatpush1.msra.mxu0 %v725
    %1668 = vmatprep.subr.mxu0 0.0
    %1669 = vmatpush1.msra.mxu0 0.0
    %1670 = vmatprep.subr.mxu0 0.0
    %1671 = vmatpush1.msra.mxu0 0.0
    %1672 = vmatprep.subr.mxu0 0.0
    %1673 = vmatpush1.msra.mxu0 0.0
    %1674 = vmatprep.subr.mxu0 0.0
    %1675 = vmatpush1.msra.mxu0 0.0
    %1676 = vmatprep.subr.mxu0 0.0
    %1677 = vmatpush1.msra.mxu0 0.0
    %1678 = vmatprep.subr.mxu0 0.0
    %1679 = vmatpush1.msra.mxu0 0.0
    %1680 = vmatprep.subr.mxu0 0.0
    %1681 = vmatpush1.msra.mxu0 0.0
    %1682 = vmatprep.subr.mxu0 0.0
    %1683 = vmatpush1.msra.mxu0 0.0
    %1684 = vmatprep.subr.mxu0 0.0
    %1685 = vmatpush1.msra.mxu0 0.0
    %1686 = vmatprep.subr.mxu0 0.0
    %1687 = vmatpush1.msra.mxu0 0.0
    %1688 = vmatprep.subr.mxu0 0.0
    %1689 = vmatpush1.msra.mxu0 0.0
    %1690 = vmatprep.subr.mxu0 0.0
    %1691 = vmatpush1.msra.mxu0 0.0
    %1692 = vmatprep.subr.mxu0 0.0
    %1693 = vmatpush1.msra.mxu0 0.0
    %1694 = vmatprep.subr.mxu0 0.0
    %1695 = vmatpush1.msra.mxu0 0.0
    %1696 = vmatprep.subr.mxu0 0.0
    %1697 = vmatpush1.msra.mxu0 0.0
    %1698 = vmatprep.subr.mxu0 0.0
    %1699 = vmatpush1.msra.mxu0 0.0
    %1700 = vmatprep.mubr.f32.mxu0 0.0
    %1701 = vmatmul.mubr.f32.gmra.mrb[0].mxu0 %v1635
    %v1702 = vpop.f32.mrb[0].mxu0
    %v1703 = vadd.f32 0.0, %v1702
    %v1704 = vpop.f32.mrb[0].mxu0
    %v1705 = vadd.f32 0.0, %v1704
    %1706 = vdwg.mxu0
    %1707 = vmatprep.subr.mxu0 %v668
    %1708 = vmatpush1.msra.mxu0 %v667
    %1709 = vmatprep.subr.mxu0 %v672
    %1710 = vmatpush1.msra.mxu0 %v671
    %1711 = vmatprep.subr.mxu0 %v676
    %1712 = vmatpush1.msra.mxu0 %v675
    %1713 = vmatprep.subr.mxu0 %v680
    %1714 = vmatpush1.msra.mxu0 %v679
    %1715 = vmatprep.subr.mxu0 %v684
    %1716 = vmatpush1.msra.mxu0 %v683
    %1717 = vmatprep.subr.mxu0 %v688
    %1718 = vmatpush1.msra.mxu0 %v687
    %1719 = vmatprep.subr.mxu0 %v692
    %1720 = vmatpush1.msra.mxu0 %v691
    %1721 = vmatprep.subr.mxu0 %v696
    %1722 = vmatpush1.msra.mxu0 %v695
    %1723 = vmatprep.subr.mxu0 %v700
    %1724 = vmatpush1.msra.mxu0 %v699
    %1725 = vmatprep.subr.mxu0 %v704
    %1726 = vmatpush1.msra.mxu0 %v703
    %1727 = vmatprep.subr.mxu0 %v708
    %1728 = vmatpush1.msra.mxu0 %v707
    %1729 = vmatprep.subr.mxu0 %v712
    %1730 = vmatpush1.msra.mxu0 %v711
    %1731 = vmatprep.subr.mxu0 %v716
    %1732 = vmatpush1.msra.mxu0 %v715
    %1733 = vmatprep.subr.mxu0 %v720
    %1734 = vmatpush1.msra.mxu0 %v719
    %1735 = vmatprep.subr.mxu0 %v724
    %1736 = vmatpush1.msra.mxu0 %v723
    %1737 = vmatprep.subr.mxu0 %v728
    %1738 = vmatpush1.msra.mxu0 %v727
    %1739 = vmatprep.subr.mxu0 0.0
    %1740 = vmatpush1.msra.mxu0 0.0
    %1741 = vmatprep.subr.mxu0 0.0
    %1742 = vmatpush1.msra.mxu0 0.0
    %1743 = vmatprep.subr.mxu0 0.0
    %1744 = vmatpush1.msra.mxu0 0.0
    %1745 = vmatprep.subr.mxu0 0.0
    %1746 = vmatpush1.msra.mxu0 0.0
    %1747 = vmatprep.subr.mxu0 0.0
    %1748 = vmatpush1.msra.mxu0 0.0
    %1749 = vmatprep.subr.mxu0 0.0
    %1750 = vmatpush1.msra.mxu0 0.0
    %1751 = vmatprep.subr.mxu0 0.0
    %1752 = vmatpush1.msra.mxu0 0.0
    %1753 = vmatprep.subr.mxu0 0.0
    %1754 = vmatpush1.msra.mxu0 0.0
    %1755 = vmatprep.subr.mxu0 0.0
    %1756 = vmatpush1.msra.mxu0 0.0
    %1757 = vmatprep.subr.mxu0 0.0
    %1758 = vmatpush1.msra.mxu0 0.0
    %1759 = vmatprep.subr.mxu0 0.0
    %1760 = vmatpush1.msra.mxu0 0.0
    %1761 = vmatprep.subr.mxu0 0.0
    %1762 = vmatpush1.msra.mxu0 0.0
    %1763 = vmatprep.subr.mxu0 0.0
    %1764 = vmatpush1.msra.mxu0 0.0
    %1765 = vmatprep.subr.mxu0 0.0
    %1766 = vmatpush1.msra.mxu0 0.0
    %1767 = vmatprep.subr.mxu0 0.0
    %1768 = vmatpush1.msra.mxu0 0.0
    %1769 = vmatprep.subr.mxu0 0.0
    %1770 = vmatpush1.msra.mxu0 0.0
    %1771 = vmatprep.mubr.f32.mxu0 0.0
    %1772 = vmatmul.mubr.f32.gmra.mrb[0].mxu0 %v1635
    %v1773 = vpop.f32.mrb[0].mxu0
    %v1774 = vadd.f32 0.0, %v1773
    %v1775 = vpop.f32.mrb[0].mxu0
    %v1776 = vadd.f32 0.0, %v1775
    %1777 = vdwg.mxu0
    %v1782 = vrot.slane %v1703, 6
    %v1783 = vrot.slane %v1705, 6
    %v1784 = vrot.slane %v1774, 6
    %v1785 = vrot.slane %v1776, 6
    %v1790 = vadd.f32 %v582, %v1782
    %v1791 = vadd.f32 %v584, %v1783
    %v1792 = vadd.f32 %v659, %v1784
    %v1793 = vadd.f32 %v661, %v1785
    %v1794 = vxor.u32 %v1790, 2147483648
    %v1795 = vmul.f32 %v1794, 1.442695
    %v1796 = vpow.pop %v1795
    %v1797 = vadd.f32 %v1796, 1.0
    %v1798 = vrcp.pop %v1797
    %v1799 = vmul.f32 1.0, %v1798
    %v1800 = vxor.u32 %v1791, 2147483648
    %v1801 = vmul.f32 %v1800, 1.442695
    %v1802 = vpow.pop %v1801
    %v1803 = vadd.f32 %v1802, 1.0
    %v1804 = vrcp.pop %v1803
    %v1805 = vmul.f32 1.0, %v1804
    %v1806 = vtanh.pop %v1792
    %v1807 = vxor.u32 %v1793, 2147483648
    %v1808 = vmul.f32 %v1807, 1.442695
    %v1809 = vpow.pop %v1808
    %v1810 = vadd.f32 %v1809, 1.0
    %v1811 = vrcp.pop %v1810
    %v1812 = vmul.f32 1.0, %v1811
    %v1814 = vrot.slane %v1633, 6
    %v1816 = vmul.f32 %v1805, %v1814
    %v1817 = vmul.f32 %v1799, %v1806
    %v1818 = vadd.f32 %v1816, %v1817
    %v1819 = vtanh.pop %v1818
    %v1820 = vmul.f32 %v1812, %v1819
    %v1822 = vrot.slane %v1820, 2
    %1824 = vmatprep.subr.mxu0 %v666
    %1825 = vmatpush1.msra.mxu0 %v665
    %1826 = vmatprep.subr.mxu0 %v670
    %1827 = vmatpush1.msra.mxu0 %v669
    %1828 = vmatprep.subr.mxu0 %v674
    %1829 = vmatpush1.msra.mxu0 %v673
    %1830 = vmatprep.subr.mxu0 %v678
    %1831 = vmatpush1.msra.mxu0 %v677
    %1832 = vmatprep.subr.mxu0 %v682
    %1833 = vmatpush1.msra.mxu0 %v681
    %1834 = vmatprep.subr.mxu0 %v686
    %1835 = vmatpush1.msra.mxu0 %v685
    %1836 = vmatprep.subr.mxu0 %v690
    %1837 = vmatpush1.msra.mxu0 %v689
    %1838 = vmatprep.subr.mxu0 %v694
    %1839 = vmatpush1.msra.mxu0 %v693
    %1840 = vmatprep.subr.mxu0 %v698
    %1841 = vmatpush1.msra.mxu0 %v697
    %1842 = vmatprep.subr.mxu0 %v702
    %1843 = vmatpush1.msra.mxu0 %v701
    %1844 = vmatprep.subr.mxu0 %v706
    %1845 = vmatpush1.msra.mxu0 %v705
    %1846 = vmatprep.subr.mxu0 %v710
    %1847 = vmatpush1.msra.mxu0 %v709
    %1848 = vmatprep.subr.mxu0 %v714
    %1849 = vmatpush1.msra.mxu0 %v713
    %1850 = vmatprep.subr.mxu0 %v718
    %1851 = vmatpush1.msra.mxu0 %v717
    %1852 = vmatprep.subr.mxu0 %v722
    %1853 = vmatpush1.msra.mxu0 %v721
    %1854 = vmatprep.subr.mxu0 %v726
    %1855 = vmatpush1.msra.mxu0 %v725
    %1856 = vmatprep.subr.mxu0 0.0
    %1857 = vmatpush1.msra.mxu0 0.0
    %1858 = vmatprep.subr.mxu0 0.0
    %1859 = vmatpush1.msra.mxu0 0.0
    %1860 = vmatprep.subr.mxu0 0.0
    %1861 = vmatpush1.msra.mxu0 0.0
    %1862 = vmatprep.subr.mxu0 0.0
    %1863 = vmatpush1.msra.mxu0 0.0
    %1864 = vmatprep.subr.mxu0 0.0
    %1865 = vmatpush1.msra.mxu0 0.0
    %1866 = vmatprep.subr.mxu0 0.0
    %1867 = vmatpush1.msra.mxu0 0.0
    %1868 = vmatprep.subr.mxu0 0.0
    %1869 = vmatpush1.msra.mxu0 0.0
    %1870 = vmatprep.subr.mxu0 0.0
    %1871 = vmatpush1.msra.mxu0 0.0
    %1872 = vmatprep.subr.mxu0 0.0
    %1873 = vmatpush1.msra.mxu0 0.0
    %1874 = vmatprep.subr.mxu0 0.0
    %1875 = vmatpush1.msra.mxu0 0.0
    %1876 = vmatprep.subr.mxu0 0.0
    %1877 = vmatpush1.msra.mxu0 0.0
    %1878 = vmatprep.subr.mxu0 0.0
    %1879 = vmatpush1.msra.mxu0 0.0
    %1880 = vmatprep.subr.mxu0 0.0
    %1881 = vmatpush1.msra.mxu0 0.0
    %1882 = vmatprep.subr.mxu0 0.0
    %1883 = vmatpush1.msra.mxu0 0.0
    %1884 = vmatprep.subr.mxu0 0.0
    %1885 = vmatpush1.msra.mxu0 0.0
    %1886 = vmatprep.subr.mxu0 0.0
    %1887 = vmatpush1.msra.mxu0 0.0
    %1888 = vmatprep.mubr.f32.mxu0 0.0
    %1889 = vmatmul.mubr.f32.gmra.mrb[0].mxu0 %v1822
    %v1890 = vpop.f32.mrb[0].mxu0
    %v1891 = vadd.f32 0.0, %v1890
    %v1892 = vpop.f32.mrb[0].mxu0
    %v1893 = vadd.f32 0.0, %v1892
    %1894 = vdwg.mxu0
    %1895 = vmatprep.subr.mxu0 %v668
    %1896 = vmatpush1.msra.mxu0 %v667
    %1897 = vmatprep.subr.mxu0 %v672
    %1898 = vmatpush1.msra.mxu0 %v671
    %1899 = vmatprep.subr.mxu0 %v676
    %1900 = vmatpush1.msra.mxu0 %v675
    %1901 = vmatprep.subr.mxu0 %v680
    %1902 = vmatpush1.msra.mxu0 %v679
    %1903 = vmatprep.subr.mxu0 %v684
    %1904 = vmatpush1.msra.mxu0 %v683
    %1905 = vmatprep.subr.mxu0 %v688
    %1906 = vmatpush1.msra.mxu0 %v687
    %1907 = vmatprep.subr.mxu0 %v692
    %1908 = vmatpush1.msra.mxu0 %v691
    %1909 = vmatprep.subr.mxu0 %v696
    %1910 = vmatpush1.msra.mxu0 %v695
    %1911 = vmatprep.subr.mxu0 %v700
    %1912 = vmatpush1.msra.mxu0 %v699
    %1913 = vmatprep.subr.mxu0 %v704
    %1914 = vmatpush1.msra.mxu0 %v703
    %1915 = vmatprep.subr.mxu0 %v708
    %1916 = vmatpush1.msra.mxu0 %v707
    %1917 = vmatprep.subr.mxu0 %v712
    %1918 = vmatpush1.msra.mxu0 %v711
    %1919 = vmatprep.subr.mxu0 %v716
    %1920 = vmatpush1.msra.mxu0 %v715
    %1921 = vmatprep.subr.mxu0 %v720
    %1922 = vmatpush1.msra.mxu0 %v719
    %1923 = vmatprep.subr.mxu0 %v724
    %1924 = vmatpush1.msra.mxu0 %v723
    %1925 = vmatprep.subr.mxu0 %v728
    %1926 = vmatpush1.msra.mxu0 %v727
    %1927 = vmatprep.subr.mxu0 0.0
    %1928 = vmatpush1.msra.mxu0 0.0
    %1929 = vmatprep.subr.mxu0 0.0
    %1930 = vmatpush1.msra.mxu0 0.0
    %1931 = vmatprep.subr.mxu0 0.0
    %1932 = vmatpush1.msra.mxu0 0.0
    %1933 = vmatprep.subr.mxu0 0.0
    %1934 = vmatpush1.msra.mxu0 0.0
    %1935 = vmatprep.subr.mxu0 0.0
    %1936 = vmatpush1.msra.mxu0 0.0
    %1937 = vmatprep.subr.mxu0 0.0
    %1938 = vmatpush1.msra.mxu0 0.0
    %1939 = vmatprep.subr.mxu0 0.0
    %1940 = vmatpush1.msra.mxu0 0.0
    %1941 = vmatprep.subr.mxu0 0.0
    %1942 = vmatpush1.msra.mxu0 0.0
    %1943 = vmatprep.subr.mxu0 0.0
    %1944 = vmatpush1.msra.mxu0 0.0
    %1945 = vmatprep.subr.mxu0 0.0
    %1946 = vmatpush1.msra.mxu0 0.0
    %1947 = vmatprep.subr.mxu0 0.0
    %1948 = vmatpush1.msra.mxu0 0.0
    %1949 = vmatprep.subr.mxu0 0.0
    %1950 = vmatpush1.msra.mxu0 0.0
    %1951 = vmatprep.subr.mxu0 0.0
    %1952 = vmatpush1.msra.mxu0 0.0
    %1953 = vmatprep.subr.mxu0 0.0
    %1954 = vmatpush1.msra.mxu0 0.0
    %1955 = vmatprep.subr.mxu0 0.0
    %1956 = vmatpush1.msra.mxu0 0.0
    %1957 = vmatprep.subr.mxu0 0.0
    %1958 = vmatpush1.msra.mxu0 0.0
    %1959 = vmatprep.mubr.f32.mxu0 0.0
    %1960 = vmatmul.mubr.f32.gmra.mrb[0].mxu0 %v1822
    %v1961 = vpop.f32.mrb[0].mxu0
    %v1962 = vadd.f32 0.0, %v1961
    %v1963 = vpop.f32.mrb[0].mxu0
    %v1964 = vadd.f32 0.0, %v1963
    %1965 = vdwg.mxu0
    %v1970 = vrot.slane %v1891, 4
    %v1971 = vrot.slane %v1893, 4
    %v1972 = vrot.slane %v1962, 4
    %v1973 = vrot.slane %v1964, 4
    %v1978 = vadd.f32 %v582, %v1970
    %v1979 = vadd.f32 %v584, %v1971
    %v1980 = vadd.f32 %v659, %v1972
    %v1981 = vadd.f32 %v661, %v1973
    %v1982 = vxor.u32 %v1978, 2147483648
    %v1983 = vmul.f32 %v1982, 1.442695
    %v1984 = vpow.pop %v1983
    %v1985 = vadd.f32 %v1984, 1.0
    %v1986 = vrcp.pop %v1985
    %v1987 = vmul.f32 1.0, %v1986
    %v1988 = vxor.u32 %v1979, 2147483648
    %v1989 = vmul.f32 %v1988, 1.442695
    %v1990 = vpow.pop %v1989
    %v1991 = vadd.f32 %v1990, 1.0
    %v1992 = vrcp.pop %v1991
    %v1993 = vmul.f32 1.0, %v1992
    %v1994 = vtanh.pop %v1980
    %v1995 = vxor.u32 %v1981, 2147483648
    %v1996 = vmul.f32 %v1995, 1.442695
    %v1997 = vpow.pop %v1996
    %v1998 = vadd.f32 %v1997, 1.0
    %v1999 = vrcp.pop %v1998
    %v2000 = vmul.f32 1.0, %v1999
    %v2002 = vrot.slane %v1818, 6
    %v2004 = vmul.f32 %v1993, %v2002
    %v2005 = vmul.f32 %v1987, %v1994
    %v2006 = vadd.f32 %v2004, %v2005
    %v2007 = vtanh.pop %v2006
    %v2008 = vmul.f32 %v2000, %v2007
    %v2010 = vrot.slane %v2008, 4
    %2012 = vmatprep.subr.mxu0 %v666
    %2013 = vmatpush1.msra.mxu0 %v665
    %2014 = vmatprep.subr.mxu0 %v670
    %2015 = vmatpush1.msra.mxu0 %v669
    %2016 = vmatprep.subr.mxu0 %v674
    %2017 = vmatpush1.msra.mxu0 %v673
    %2018 = vmatprep.subr.mxu0 %v678
    %2019 = vmatpush1.msra.mxu0 %v677
    %2020 = vmatprep.subr.mxu0 %v682
    %2021 = vmatpush1.msra.mxu0 %v681
    %2022 = vmatprep.subr.mxu0 %v686
    %2023 = vmatpush1.msra.mxu0 %v685
    %2024 = vmatprep.subr.mxu0 %v690
    %2025 = vmatpush1.msra.mxu0 %v689
    %2026 = vmatprep.subr.mxu0 %v694
    %2027 = vmatpush1.msra.mxu0 %v693
    %2028 = vmatprep.subr.mxu0 %v698
    %2029 = vmatpush1.msra.mxu0 %v697
    %2030 = vmatprep.subr.mxu0 %v702
    %2031 = vmatpush1.msra.mxu0 %v701
    %2032 = vmatprep.subr.mxu0 %v706
    %2033 = vmatpush1.msra.mxu0 %v705
    %2034 = vmatprep.subr.mxu0 %v710
    %2035 = vmatpush1.msra.mxu0 %v709
    %2036 = vmatprep.subr.mxu0 %v714
    %2037 = vmatpush1.msra.mxu0 %v713
    %2038 = vmatprep.subr.mxu0 %v718
    %2039 = vmatpush1.msra.mxu0 %v717
    %2040 = vmatprep.subr.mxu0 %v722
    %2041 = vmatpush1.msra.mxu0 %v721
    %2042 = vmatprep.subr.mxu0 %v726
    %2043 = vmatpush1.msra.mxu0 %v725
    %2044 = vmatprep.subr.mxu0 0.0
    %2045 = vmatpush1.msra.mxu0 0.0
    %2046 = vmatprep.subr.mxu0 0.0
    %2047 = vmatpush1.msra.mxu0 0.0
    %2048 = vmatprep.subr.mxu0 0.0
    %2049 = vmatpush1.msra.mxu0 0.0
    %2050 = vmatprep.subr.mxu0 0.0
    %2051 = vmatpush1.msra.mxu0 0.0
    %2052 = vmatprep.subr.mxu0 0.0
    %2053 = vmatpush1.msra.mxu0 0.0
    %2054 = vmatprep.subr.mxu0 0.0
    %2055 = vmatpush1.msra.mxu0 0.0
    %2056 = vmatprep.subr.mxu0 0.0
    %2057 = vmatpush1.msra.mxu0 0.0
    %2058 = vmatprep.subr.mxu0 0.0
    %2059 = vmatpush1.msra.mxu0 0.0
    %2060 = vmatprep.subr.mxu0 0.0
    %2061 = vmatpush1.msra.mxu0 0.0
    %2062 = vmatprep.subr.mxu0 0.0
    %2063 = vmatpush1.msra.mxu0 0.0
    %2064 = vmatprep.subr.mxu0 0.0
    %2065 = vmatpush1.msra.mxu0 0.0
    %2066 = vmatprep.subr.mxu0 0.0
    %2067 = vmatpush1.msra.mxu0 0.0
    %2068 = vmatprep.subr.mxu0 0.0
    %2069 = vmatpush1.msra.mxu0 0.0
    %2070 = vmatprep.subr.mxu0 0.0
    %2071 = vmatpush1.msra.mxu0 0.0
    %2072 = vmatprep.subr.mxu0 0.0
    %2073 = vmatpush1.msra.mxu0 0.0
    %2074 = vmatprep.subr.mxu0 0.0
    %2075 = vmatpush1.msra.mxu0 0.0
    %2076 = vmatprep.mubr.f32.mxu0 0.0
    %2077 = vmatmul.mubr.f32.gmra.mrb[0].mxu0 %v2010
    %v2078 = vpop.f32.mrb[0].mxu0
    %v2079 = vadd.f32 0.0, %v2078
    %v2080 = vpop.f32.mrb[0].mxu0
    %v2081 = vadd.f32 0.0, %v2080
    %2082 = vdwg.mxu0
    %2083 = vmatprep.subr.mxu0 %v668
    %2084 = vmatpush1.msra.mxu0 %v667
    %2085 = vmatprep.subr.mxu0 %v672
    %2086 = vmatpush1.msra.mxu0 %v671
    %2087 = vmatprep.subr.mxu0 %v676
    %2088 = vmatpush1.msra.mxu0 %v675
    %2089 = vmatprep.subr.mxu0 %v680
    %2090 = vmatpush1.msra.mxu0 %v679
    %2091 = vmatprep.subr.mxu0 %v684
    %2092 = vmatpush1.msra.mxu0 %v683
    %2093 = vmatprep.subr.mxu0 %v688
    %2094 = vmatpush1.msra.mxu0 %v687
    %2095 = vmatprep.subr.mxu0 %v692
    %2096 = vmatpush1.msra.mxu0 %v691
    %2097 = vmatprep.subr.mxu0 %v696
    %2098 = vmatpush1.msra.mxu0 %v695
    %2099 = vmatprep.subr.mxu0 %v700
    %2100 = vmatpush1.msra.mxu0 %v699
    %2101 = vmatprep.subr.mxu0 %v704
    %2102 = vmatpush1.msra.mxu0 %v703
    %2103 = vmatprep.subr.mxu0 %v708
    %2104 = vmatpush1.msra.mxu0 %v707
    %2105 = vmatprep.subr.mxu0 %v712
    %2106 = vmatpush1.msra.mxu0 %v711
    %2107 = vmatprep.subr.mxu0 %v716
    %2108 = vmatpush1.msra.mxu0 %v715
    %2109 = vmatprep.subr.mxu0 %v720
    %2110 = vmatpush1.msra.mxu0 %v719
    %2111 = vmatprep.subr.mxu0 %v724
    %2112 = vmatpush1.msra.mxu0 %v723
    %2113 = vmatprep.subr.mxu0 %v728
    %2114 = vmatpush1.msra.mxu0 %v727
    %2115 = vmatprep.subr.mxu0 0.0
    %2116 = vmatpush1.msra.mxu0 0.0
    %2117 = vmatprep.subr.mxu0 0.0
    %2118 = vmatpush1.msra.mxu0 0.0
    %2119 = vmatprep.subr.mxu0 0.0
    %2120 = vmatpush1.msra.mxu0 0.0
    %2121 = vmatprep.subr.mxu0 0.0
    %2122 = vmatpush1.msra.mxu0 0.0
    %2123 = vmatprep.subr.mxu0 0.0
    %2124 = vmatpush1.msra.mxu0 0.0
    %2125 = vmatprep.subr.mxu0 0.0
    %2126 = vmatpush1.msra.mxu0 0.0
    %2127 = vmatprep.subr.mxu0 0.0
    %2128 = vmatpush1.msra.mxu0 0.0
    %2129 = vmatprep.subr.mxu0 0.0
    %2130 = vmatpush1.msra.mxu0 0.0
    %2131 = vmatprep.subr.mxu0 0.0
    %2132 = vmatpush1.msra.mxu0 0.0
    %2133 = vmatprep.subr.mxu0 0.0
    %2134 = vmatpush1.msra.mxu0 0.0
    %2135 = vmatprep.subr.mxu0 0.0
    %2136 = vmatpush1.msra.mxu0 0.0
    %2137 = vmatprep.subr.mxu0 0.0
    %2138 = vmatpush1.msra.mxu0 0.0
    %2139 = vmatprep.subr.mxu0 0.0
    %2140 = vmatpush1.msra.mxu0 0.0
    %2141 = vmatprep.subr.mxu0 0.0
    %2142 = vmatpush1.msra.mxu0 0.0
    %2143 = vmatprep.subr.mxu0 0.0
    %2144 = vmatpush1.msra.mxu0 0.0
    %2145 = vmatprep.subr.mxu0 0.0
    %2146 = vmatpush1.msra.mxu0 0.0
    %2147 = vmatprep.mubr.f32.mxu0 0.0
    %2148 = vmatmul.mubr.f32.gmra.mrb[0].mxu0 %v2010
    %v2149 = vpop.f32.mrb[0].mxu0
    %v2150 = vadd.f32 0.0, %v2149
    %v2151 = vpop.f32.mrb[0].mxu0
    %v2152 = vadd.f32 0.0, %v2151
    %2153 = vdwg.mxu0
    %v2158 = vrot.slane %v2079, 2
    %v2159 = vrot.slane %v2081, 2
    %v2160 = vrot.slane %v2150, 2
    %v2161 = vrot.slane %v2152, 2
    %v2166 = vadd.f32 %v582, %v2158
    %v2167 = vadd.f32 %v584, %v2159
    %v2168 = vadd.f32 %v659, %v2160
    %v2169 = vadd.f32 %v661, %v2161
    %v2170 = vxor.u32 %v2166, 2147483648
    %v2171 = vmul.f32 %v2170, 1.442695
    %v2172 = vpow.pop %v2171
    %v2173 = vadd.f32 %v2172, 1.0
    %v2174 = vrcp.pop %v2173
    %v2175 = vmul.f32 1.0, %v2174
    %v2176 = vxor.u32 %v2167, 2147483648
    %v2177 = vmul.f32 %v2176, 1.442695
    %v2178 = vpow.pop %v2177
    %v2179 = vadd.f32 %v2178, 1.0
    %v2180 = vrcp.pop %v2179
    %v2181 = vmul.f32 1.0, %v2180
    %v2182 = vtanh.pop %v2168
    %v2183 = vxor.u32 %v2169, 2147483648
    %v2184 = vmul.f32 %v2183, 1.442695
    %v2185 = vpow.pop %v2184
    %v2186 = vadd.f32 %v2185, 1.0
    %v2187 = vrcp.pop %v2186
    %v2188 = vmul.f32 1.0, %v2187
    %v2190 = vrot.slane %v2006, 6
    %v2192 = vmul.f32 %v2181, %v2190
    %v2193 = vmul.f32 %v2175, %v2182
    %v2194 = vadd.f32 %v2192, %v2193
    %v2195 = vtanh.pop %v2194
    %v2196 = vmul.f32 %v2188, %v2195
    %vm2197 = vcmask 1041408
    %v2198 = vsel %vm2197, %v898, %v1083
    %vm2199 = vcmask 1043456
    %v2200 = vsel %vm2199, %v2198, %v1271
    %vm2201 = vcmask 1045504
    %v2202 = vsel %vm2201, %v2200, %v1459
    %v2203 = vsel %vm2197, %v1635, %v1820
    %v2204 = vsel %vm2199, %v2203, %v2008
    %v2205 = vsel %vm2201, %v2204, %v2196
    %v2206 = vld [vmem:[#allocation7] sm:$0xff]
    %v2207 = vld [vmem:[#allocation7 + $0x8] sm:$0xff]
    %v2208 = vld [vmem:[#allocation7 + $0x10] sm:$0xff]
    %v2209 = vld [vmem:[#allocation7 + $0x18] sm:$0xff]
    %v2210 = vld [vmem:[#allocation7 + $0x20] sm:$0xff]
    %v2211 = vld [vmem:[#allocation7 + $0x28] sm:$0xff]
    %v2212 = vld [vmem:[#allocation7 + $0x30] sm:$0xff]
    %v2213 = vld [vmem:[#allocation7 + $0x38] sm:$0xff]
    %v2214 = vld [vmem:[#allocation7 + $0x40] sm:$0xff]
    %v2215 = vld [vmem:[#allocation7 + $0x48] sm:$0xff]
    %v2216 = vld [vmem:[#allocation7 + $0x50] sm:$0xff]
    %v2217 = vld [vmem:[#allocation7 + $0x58] sm:$0xff]
    %v2218 = vld [vmem:[#allocation7 + $0x60] sm:$0xff]
    %v2219 = vld [vmem:[#allocation7 + $0x68] sm:$0xff]
    %v2220 = vld [vmem:[#allocation7 + $0x70] sm:$0xff]
    %v2221 = vld [vmem:[#allocation7 + $0x78] sm:$0xff]
    %v2222 = vld [vmem:[#allocation7 + $0x80] sm:$0xff]
    %v2223 = vld [vmem:[#allocation7 + $0x88] sm:$0xff]
    %v2224 = vld [vmem:[#allocation7 + $0x90] sm:$0xff]
    %v2225 = vld [vmem:[#allocation7 + $0x98] sm:$0xff]
    %v2226 = vld [vmem:[#allocation7 + $0xa0] sm:$0xff]
    %v2227 = vld [vmem:[#allocation7 + $0xa8] sm:$0xff]
    %v2228 = vld [vmem:[#allocation7 + $0xb0] sm:$0xff]
    %v2229 = vld [vmem:[#allocation7 + $0xb8] sm:$0xff]
    %v2230 = vld [vmem:[#allocation7 + $0xc0] sm:$0xff]
    %v2231 = vld [vmem:[#allocation7 + $0xc8] sm:$0xff]
    %v2232 = vld [vmem:[#allocation7 + $0xd0] sm:$0xff]
    %v2233 = vld [vmem:[#allocation7 + $0xd8] sm:$0xff]
    %v2234 = vld [vmem:[#allocation7 + $0xe0] sm:$0xff]
    %v2235 = vld [vmem:[#allocation7 + $0xe8] sm:$0xff]
    %v2236 = vld [vmem:[#allocation7 + $0xf0] sm:$0xff]
    %v2237 = vld [vmem:[#allocation7 + $0xf8] sm:$0xff]
    %v2238 = vld [vmem:[%s9] sm:$0x3]
    %v2240 = vlaneseq
    %v2241 = vshrl.u32 %v2240, 7
    %v2242 = vsub.s32 0, %v2241
    %v2243 = vrot.slane %v2238, %v2242
    %v2244 = vlaneseq
    %v2245 = vshrl.u32 %v2244, 7
    %v2246 = vsub.s32 1, %v2245
    %v2247 = vrot.slane %v2238, %v2246
    %2250 = vmatprep.subr.mxu0 %v2207
    %2251 = vmatpush1.msra.mxu0 %v2206
    %2252 = vmatprep.subr.mxu0 %v2209
    %2253 = vmatpush1.msra.mxu0 %v2208
    %2254 = vmatprep.subr.mxu0 %v2211
    %2255 = vmatpush1.msra.mxu0 %v2210
    %2256 = vmatprep.subr.mxu0 %v2213
    %2257 = vmatpush1.msra.mxu0 %v2212
    %2258 = vmatprep.subr.mxu0 %v2215
    %2259 = vmatpush1.msra.mxu0 %v2214
    %2260 = vmatprep.subr.mxu0 %v2217
    %2261 = vmatpush1.msra.mxu0 %v2216
    %2262 = vmatprep.subr.mxu0 %v2219
    %2263 = vmatpush1.msra.mxu0 %v2218
    %2264 = vmatprep.subr.mxu0 %v2221
    %2265 = vmatpush1.msra.mxu0 %v2220
    %2266 = vmatprep.subr.mxu0 %v2223
    %2267 = vmatpush1.msra.mxu0 %v2222
    %2268 = vmatprep.subr.mxu0 %v2225
    %2269 = vmatpush1.msra.mxu0 %v2224
    %2270 = vmatprep.subr.mxu0 %v2227
    %2271 = vmatpush1.msra.mxu0 %v2226
    %2272 = vmatprep.subr.mxu0 %v2229
    %2273 = vmatpush1.msra.mxu0 %v2228
    %2274 = vmatprep.subr.mxu0 %v2231
    %2275 = vmatpush1.msra.mxu0 %v2230
    %2276 = vmatprep.subr.mxu0 %v2233
    %2277 = vmatpush1.msra.mxu0 %v2232
    %2278 = vmatprep.subr.mxu0 %v2235
    %2279 = vmatpush1.msra.mxu0 %v2234
    %2280 = vmatprep.subr.mxu0 %v2237
    %2281 = vmatpush1.msra.mxu0 %v2236
    %2282 = vmatprep.subr.mxu0 0.0
    %2283 = vmatpush1.msra.mxu0 0.0
    %2284 = vmatprep.subr.mxu0 0.0
    %2285 = vmatpush1.msra.mxu0 0.0
    %2286 = vmatprep.subr.mxu0 0.0
    %2287 = vmatpush1.msra.mxu0 0.0
    %2288 = vmatprep.subr.mxu0 0.0
    %2289 = vmatpush1.msra.mxu0 0.0
    %2290 = vmatprep.subr.mxu0 0.0
    %2291 = vmatpush1.msra.mxu0 0.0
    %2292 = vmatprep.subr.mxu0 0.0
    %2293 = vmatpush1.msra.mxu0 0.0
    %2294 = vmatprep.subr.mxu0 0.0
    %2295 = vmatpush1.msra.mxu0 0.0
    %2296 = vmatprep.subr.mxu0 0.0
    %2297 = vmatpush1.msra.mxu0 0.0
    %2298 = vmatprep.subr.mxu0 0.0
    %2299 = vmatpush1.msra.mxu0 0.0
    %2300 = vmatprep.subr.mxu0 0.0
    %2301 = vmatpush1.msra.mxu0 0.0
    %2302 = vmatprep.subr.mxu0 0.0
    %2303 = vmatpush1.msra.mxu0 0.0
    %2304 = vmatprep.subr.mxu0 0.0
    %2305 = vmatpush1.msra.mxu0 0.0
    %2306 = vmatprep.subr.mxu0 0.0
    %2307 = vmatpush1.msra.mxu0 0.0
    %2308 = vmatprep.subr.mxu0 0.0
    %2309 = vmatpush1.msra.mxu0 0.0
    %2310 = vmatprep.subr.mxu0 0.0
    %2311 = vmatpush1.msra.mxu0 0.0
    %2312 = vmatprep.subr.mxu0 0.0
    %2313 = vmatpush1.msra.mxu0 0.0
    %2314 = vmatprep.mubr.f32.mxu0 0.0
    %2315 = vmatmul.mubr.f32.gmra.mrb[0].mxu0 %v2202
    %v2316 = vpop.f32.mrb[0].mxu0
    %v2317 = vadd.f32 %v2243, %v2316
    %v2318 = vpop.f32.mrb[0].mxu0
    %v2319 = vadd.f32 %v2247, %v2318
    %2320 = vmatprep.mubr.f32.mxu0 0.0
    %2321 = vmatmul.mubr.f32.gmra.mrb[0].mxu0 %v2205
    %v2322 = vpop.f32.mrb[0].mxu0
    %v2323 = vadd.f32 %v2243, %v2322
    %v2324 = vpop.f32.mrb[0].mxu0
    %v2325 = vadd.f32 %v2247, %v2324
    %2326 = vdwg.mxu0
    %v2327 = vmax.f32 %v2317, 0.0
    %v2328 = vmax.f32 %v2319, 0.0
    %v2329 = vmax.f32 %v2323, 0.0
    %v2330 = vmax.f32 %v2325, 0.0
    %v2331 = vld [vmem:[#allocation9] sm:$0xff]
    %v2332 = vld [vmem:[#allocation9 + $0x8] sm:$0xff]
    %v2333 = vld [vmem:[#allocation9 + $0x10] sm:$0xff]
    %v2334 = vld [vmem:[#allocation9 + $0x18] sm:$0xff]
    %v2335 = vld [vmem:[#allocation9 + $0x20] sm:$0xff]
    %v2336 = vld [vmem:[#allocation9 + $0x28] sm:$0xff]
    %v2337 = vld [vmem:[#allocation9 + $0x30] sm:$0xff]
    %v2338 = vld [vmem:[#allocation9 + $0x38] sm:$0xff]
    %v2339 = vld [vmem:[#allocation9 + $0x40] sm:$0xff]
    %v2340 = vld [vmem:[#allocation9 + $0x48] sm:$0xff]
    %v2341 = vld [vmem:[#allocation9 + $0x50] sm:$0xff]
    %v2342 = vld [vmem:[#allocation9 + $0x58] sm:$0xff]
    %v2343 = vld [vmem:[#allocation9 + $0x60] sm:$0xff]
    %v2344 = vld [vmem:[#allocation9 + $0x68] sm:$0xff]
    %v2345 = vld [vmem:[#allocation9 + $0x70] sm:$0xff]
    %v2346 = vld [vmem:[#allocation9 + $0x78] sm:$0xff]
    %v2347 = vld [vmem:[#allocation9 + $0x80] sm:$0xff]
    %v2348 = vld [vmem:[#allocation9 + $0x88] sm:$0xff]
    %v2349 = vld [vmem:[#allocation9 + $0x90] sm:$0xff]
    %v2350 = vld [vmem:[#allocation9 + $0x98] sm:$0xff]
    %v2351 = vld [vmem:[#allocation9 + $0xa0] sm:$0xff]
    %v2352 = vld [vmem:[#allocation9 + $0xa8] sm:$0xff]
    %v2353 = vld [vmem:[#allocation9 + $0xb0] sm:$0xff]
    %v2354 = vld [vmem:[#allocation9 + $0xb8] sm:$0xff]
    %v2355 = vld [vmem:[#allocation9 + $0xc0] sm:$0xff]
    %v2356 = vld [vmem:[#allocation9 + $0xc8] sm:$0xff]
    %v2357 = vld [vmem:[#allocation9 + $0xd0] sm:$0xff]
    %v2358 = vld [vmem:[#allocation9 + $0xd8] sm:$0xff]
    %v2359 = vld [vmem:[#allocation9 + $0xe0] sm:$0xff]
    %v2360 = vld [vmem:[#allocation9 + $0xe8] sm:$0xff]
    %v2361 = vld [vmem:[#allocation9 + $0xf0] sm:$0xff]
    %v2362 = vld [vmem:[#allocation9 + $0xf8] sm:$0xff]
    %v2363 = vld [vmem:[%s11] sm:$0x1]
    %v2365 = vlaneseq
    %v2366 = vshrl.u32 %v2365, 7
    %v2367 = vsub.s32 0, %v2366
    %v2368 = vrot.slane %v2363, %v2367
    %2370 = vmatprep.subr.mxu0 0.0
    %2371 = vmatpush1.msra.mxu0 %v2331
    %2372 = vmatprep.subr.mxu0 0.0
    %2373 = vmatpush1.msra.mxu0 %v2332
    %2374 = vmatprep.subr.mxu0 0.0
    %2375 = vmatpush1.msra.mxu0 %v2333
    %2376 = vmatprep.subr.mxu0 0.0
    %2377 = vmatpush1.msra.mxu0 %v2334
    %2378 = vmatprep.subr.mxu0 0.0
    %2379 = vmatpush1.msra.mxu0 %v2335
    %2380 = vmatprep.subr.mxu0 0.0
    %2381 = vmatpush1.msra.mxu0 %v2336
    %2382 = vmatprep.subr.mxu0 0.0
    %2383 = vmatpush1.msra.mxu0 %v2337
    %2384 = vmatprep.subr.mxu0 0.0
    %2385 = vmatpush1.msra.mxu0 %v2338
    %2386 = vmatprep.subr.mxu0 0.0
    %2387 = vmatpush1.msra.mxu0 %v2339
    %2388 = vmatprep.subr.mxu0 0.0
    %2389 = vmatpush1.msra.mxu0 %v2340
    %2390 = vmatprep.subr.mxu0 0.0
    %2391 = vmatpush1.msra.mxu0 %v2341
    %2392 = vmatprep.subr.mxu0 0.0
    %2393 = vmatpush1.msra.mxu0 %v2342
    %2394 = vmatprep.subr.mxu0 0.0
    %2395 = vmatpush1.msra.mxu0 %v2343
    %2396 = vmatprep.subr.mxu0 0.0
    %2397 = vmatpush1.msra.mxu0 %v2344
    %2398 = vmatprep.subr.mxu0 0.0
    %2399 = vmatpush1.msra.mxu0 %v2345
    %2400 = vmatprep.subr.mxu0 0.0
    %2401 = vmatpush1.msra.mxu0 %v2346
    %2402 = vmatprep.subr.mxu0 0.0
    %2403 = vmatpush1.msra.mxu0 %v2347
    %2404 = vmatprep.subr.mxu0 0.0
    %2405 = vmatpush1.msra.mxu0 %v2348
    %2406 = vmatprep.subr.mxu0 0.0
    %2407 = vmatpush1.msra.mxu0 %v2349
    %2408 = vmatprep.subr.mxu0 0.0
    %2409 = vmatpush1.msra.mxu0 %v2350
    %2410 = vmatprep.subr.mxu0 0.0
    %2411 = vmatpush1.msra.mxu0 %v2351
    %2412 = vmatprep.subr.mxu0 0.0
    %2413 = vmatpush1.msra.mxu0 %v2352
    %2414 = vmatprep.subr.mxu0 0.0
    %2415 = vmatpush1.msra.mxu0 %v2353
    %2416 = vmatprep.subr.mxu0 0.0
    %2417 = vmatpush1.msra.mxu0 %v2354
    %2418 = vmatprep.subr.mxu0 0.0
    %2419 = vmatpush1.msra.mxu0 %v2355
    %2420 = vmatprep.subr.mxu0 0.0
    %2421 = vmatpush1.msra.mxu0 %v2356
    %2422 = vmatprep.subr.mxu0 0.0
    %2423 = vmatpush1.msra.mxu0 %v2357
    %2424 = vmatprep.subr.mxu0 0.0
    %2425 = vmatpush1.msra.mxu0 %v2358
    %2426 = vmatprep.subr.mxu0 0.0
    %2427 = vmatpush1.msra.mxu0 %v2359
    %2428 = vmatprep.subr.mxu0 0.0
    %2429 = vmatpush1.msra.mxu0 %v2360
    %2430 = vmatprep.subr.mxu0 0.0
    %2431 = vmatpush1.msra.mxu0 %v2361
    %2432 = vmatprep.subr.mxu0 0.0
    %2433 = vmatpush1.msra.mxu0 %v2362
    %2434 = vmatprep.mubr.f32.mxu0 %v2328
    %2435 = vmatmul.mubr.f32.gmra.mrb[0].mxu0 %v2327
    %v2436 = vpop.f32.mrb[0].mxu0
    %v2437 = vadd.f32 %v2368, %v2436
    %v2438 = vpop.f32.mrb[0].mxu0
    %2439 = vmatprep.mubr.f32.mxu0 %v2330
    %2440 = vmatmul.mubr.f32.gmra.mrb[0].mxu0 %v2329
    %v2441 = vpop.f32.mrb[0].mxu0
    %v2442 = vadd.f32 %v2368, %v2441
    %v2443 = vpop.f32.mrb[0].mxu0
    %2444 = vdwg.mxu0
    %2445 = vst [vmem:[%s14] sm:$0xff] %v2437
    %2446 = vst [vmem:[%s14 + $0x8] sm:$0xff] %v2442
    %2447 = vst [vmem:[%s15 - $0x6] sm:$0xc0] %v2196
    %2448 = vst [vmem:[%s16 - $0x6] sm:$0xc0] %v2194
    // Predicated region
    $region78: #{dqn_lstm_latefusion.1} parent=1 // pred_check
      _
    $region79: #{dqn_lstm_latefusion.1} parent=1 // pred_check_branch
      %2450 = sbr.rel (0) target = $region81
    $region80: #{dqn_lstm_latefusion.1} parent=1 // pred_region
      _
    $region81: #{dqn_lstm_latefusion.1} parent=1 // pred_fallthru
      _
    // Predicated region
    $region82: #{dqn_lstm_latefusion.1} parent=1 // pred_check
      _
    $region83: #{dqn_lstm_latefusion.1} parent=1 // pred_check_branch
      %2452 = sbr.rel (0) target = $region85
    $region84: #{dqn_lstm_latefusion.1} parent=1 // pred_region
      _
    $region85: #{dqn_lstm_latefusion.1} parent=1 // pred_fallthru
      _
    // Predicated region
    $region86: #{dqn_lstm_latefusion.1} parent=1 // pred_check
      _
    $region87: #{dqn_lstm_latefusion.1} parent=1 // pred_check_branch
      %2454 = sbr.rel (0) target = $region89
    $region88: #{dqn_lstm_latefusion.1} parent=1 // pred_region
      _
    $region89: #{dqn_lstm_latefusion.1} parent=1 // pred_fallthru
      _
    // Predicated region
    $region90: #{dqn_lstm_latefusion.1} parent=1 // pred_check
      _
    $region91: #{dqn_lstm_latefusion.1} parent=1 // pred_check_branch
      %2456 = sbr.rel (0) target = $region93
    $region92: #{dqn_lstm_latefusion.1} parent=1 // pred_region
      _
    $region93: #{dqn_lstm_latefusion.1} parent=1 // pred_fallthru
      _
    // Predicated region
    $region94: #{dqn_lstm_latefusion.1} parent=1 // pred_check
      _
    $region95: #{dqn_lstm_latefusion.1} parent=1 // pred_check_branch
      %2458 = sbr.rel (0) target = $region97
    $region96: #{dqn_lstm_latefusion.1} parent=1 // pred_region
      _
    $region97: #{dqn_lstm_latefusion.1} parent=1 // pred_fallthru
      _
    // Predicated region
    $region98: #{dqn_lstm_latefusion.1} parent=1 // pred_check
      _
    $region99: #{dqn_lstm_latefusion.1} parent=1 // pred_check_branch
      %2460 = sbr.rel (0) target = $region101
    $region100: #{dqn_lstm_latefusion.1} parent=1 // pred_region
      _
    $region101: #{dqn_lstm_latefusion.1} parent=1 // pred_fallthru
      _
    %2461 = vsyncpa [#allocation3], 1
    %2462 = vsyncpa [#allocation5], 1
    %2463 = vsyncpa [#allocation8], 1

</llo_original>
